<compile_context>
chip_gen: v7x
topology: tpu7x:2x2x1
jax: 0.10.0
libtpu: 0.0.40
codegen_flags: <defaults>
</compile_context>

<pallas_src>
import functools
import math

import jax
import jax.numpy as jnp
from jax.experimental import pallas as pl
from jax.experimental.pallas import tpu as pltpu

N_EMBD = 64
N_HEAD = 4
HEAD_SIZE = N_EMBD // N_HEAD
BLOCK_SIZE = 32          # max sequence length supported by the causal mask
LN_EPS = 1e-5
NEG_INF = -1e30


# ----------------------------------------------------------------------------
# QLinear effective (quantized) weight -- parameter prep, plain JAX
# ----------------------------------------------------------------------------
def qlinear_effective_weight(w, e, b):
    b_rel = jnp.maximum(b, 0.0)
    min_val = jnp.where(b_rel > 0, -(2.0 ** (b_rel - 1.0)), jnp.zeros_like(b_rel))
    max_val = jnp.where(b_rel > 0, 2.0 ** (b_rel - 1.0) - 1.0, jnp.zeros_like(b_rel))
    scaled = (2.0 ** (-e)) * w
    qw = jnp.maximum(jnp.minimum(scaled, max_val), min_val)
    # forward value of (qw.round() - qw).detach() + qw  ==  round(qw)
    return (2.0 ** e) * jnp.round(qw)


def init_qlinear(key, in_f, out_f, bias=True):
    scale = 1.0 / math.sqrt(in_f)
    w = jax.random.uniform(key, (out_f, in_f), jnp.float32, minval=-scale, maxval=scale)
    e = jnp.full((out_f, 1), -8.0, jnp.float32)
    b = jnp.full((out_f, 1), 32.0, jnp.float32)
    w_eff = qlinear_effective_weight(w, e, b)
    bias_arr = jnp.zeros((1, out_f), jnp.float32) if bias else None
    return w_eff, bias_arr


def init_block_params(key):
    keys = jax.random.split(key, 16)
    # per-head key/query/value QLinear(64, 16, bias=False); stack heads on rows
    wk_heads, wq_heads, wv_heads = [], [], []
    for h in range(N_HEAD):
        wk_h, _ = init_qlinear(keys[3 * h + 0], N_EMBD, HEAD_SIZE, bias=False)
        wq_h, _ = init_qlinear(keys[3 * h + 1], N_EMBD, HEAD_SIZE, bias=False)
        wv_h, _ = init_qlinear(keys[3 * h + 2], N_EMBD, HEAD_SIZE, bias=False)
        wk_heads.append(wk_h)
        wq_heads.append(wq_h)
        wv_heads.append(wv_h)
    wk = jnp.concatenate(wk_heads, axis=0)   # (64, 64)  PyTorch layout (out, in)
    wq = jnp.concatenate(wq_heads, axis=0)   # (64, 64)
    wv = jnp.concatenate(wv_heads, axis=0)   # (64, 64)

    wproj, bproj = init_qlinear(keys[12], N_EMBD, N_EMBD, bias=True)
    w1, b1 = init_qlinear(keys[13], N_EMBD, 4 * N_EMBD, bias=True)
    w2, b2 = init_qlinear(keys[14], 4 * N_EMBD, N_EMBD, bias=True)

    return dict(
        ln1_g=jnp.ones((1, N_EMBD), jnp.float32),
        ln1_b=jnp.zeros((1, N_EMBD), jnp.float32),
        ln2_g=jnp.ones((1, N_EMBD), jnp.float32),
        ln2_b=jnp.zeros((1, N_EMBD), jnp.float32),
        wq=wq, wk=wk, wv=wv,
        wproj=wproj, bproj=bproj,
        w1=w1, b1=b1, w2=w2, b2=b2,
    )


def pack_params(params):
    """Pre-transpose / fuse / downcast parameters for the kernel (one-time)."""
    bf16 = jnp.bfloat16
    f32 = jnp.float32
    # Fused QKV weight, pre-transposed to (in, out): columns = [Q | K | V],
    # each ordered head0..head3 (16 cols per head). Quantized values
    # (small int * 2^-8) are exactly representable in bf16 for the default init.
    wqkv = jnp.concatenate(
        [params["wq"].T, params["wk"].T, params["wv"].T], axis=1).astype(bf16)  # (64,192)
    wproj = params["wproj"].T.astype(bf16)          # (64, 64)   rows h*16:(h+1)*16 = head h
    w1 = params["w1"].T.astype(bf16)                # (64, 256)
    w2 = params["w2"].T.astype(bf16)                # (256, 64)
    zeros = jnp.zeros((1, N_EMBD), f32)
    # One small f32 blob for all 64-wide vectors (LN params + biases).
    vecs = jnp.concatenate(
        [params["ln1_g"].reshape(1, -1), params["ln1_b"].reshape(1, -1),
         params["ln2_g"].reshape(1, -1), params["ln2_b"].reshape(1, -1),
         params["bproj"].reshape(1, -1), params["b2"].reshape(1, -1),
         zeros, zeros], axis=0).astype(f32)         # (8, 64)
    b1 = params["b1"].reshape(1, -1).astype(f32)    # (1, 256)
    return dict(wqkv=wqkv, wproj=wproj, w1=w1, w2=w2, vecs=vecs, b1=b1)


# ----------------------------------------------------------------------------
# Pallas kernel: transformer Block on a block of `bblk` batch elements
# ----------------------------------------------------------------------------
def _layer_norm(x, gamma, beta):
    mu = jnp.mean(x, axis=-1, keepdims=True)
    var = jnp.mean((x - mu) ** 2, axis=-1, keepdims=True)
    return (x - mu) * jax.lax.rsqrt(var + LN_EPS) * gamma + beta


def block_kernel(x_ref, vecs_ref, b1_ref, wqkv_ref, wproj_ref, w1_ref, w2_ref,
                 o_ref, *, bblk, seq):
    f32 = jnp.float32
    bf16 = jnp.bfloat16
    rows = bblk * seq

    x = x_ref[...].astype(f32)                   # HBM slab is bf16; math in f32
    vecs = vecs_ref[...]                         # (8, C) f32
    ln1_g, ln1_b = vecs[0:1, :], vecs[1:2, :]
    ln2_g, ln2_b = vecs[2:3, :], vecs[3:4, :]
    bproj, b2 = vecs[4:5, :], vecs[5:6, :]
    b1 = b1_ref[...]                             # (1, 4C) f32

    # ----- x = x + MultiHeadAttention(LayerNorm1(x)) -----
    h = _layer_norm(x, ln1_g, ln1_b)
    qkv = jnp.dot(h.astype(bf16), wqkv_ref[...],
                  preferred_element_type=f32)    # (rows, 3C) f32

    row_ids = jax.lax.broadcasted_iota(jnp.int32, (seq, seq), 0)
    col_ids = jax.lax.broadcasted_iota(jnp.int32, (seq, seq), 1)
    causal = (col_ids <= row_ids)[None, :, :]    # (1, seq, seq)

    scale = float(N_EMBD) ** -0.5                # PyTorch source uses C**-0.5
    head_outs = []
    for hh in range(N_HEAD):
        q_sl = slice(0 * N_EMBD + hh * HEAD_SIZE, 0 * N_EMBD + (hh + 1) * HEAD_SIZE)
        k_sl = slice(1 * N_EMBD + hh * HEAD_SIZE, 1 * N_EMBD + (hh + 1) * HEAD_SIZE)
        v_sl = slice(2 * N_EMBD + hh * HEAD_SIZE, 2 * N_EMBD + (hh + 1) * HEAD_SIZE)
        qh = qkv[:, q_sl].reshape(bblk, seq, HEAD_SIZE).astype(bf16)
        kh = qkv[:, k_sl].reshape(bblk, seq, HEAD_SIZE).astype(bf16)
        vh = qkv[:, v_sl].reshape(bblk, seq, HEAD_SIZE).astype(bf16)
        wei = jnp.einsum("btd,bsd->bts", qh, kh,
                         preferred_element_type=f32) * scale
        wei = jnp.where(causal, wei, NEG_INF)
        m = jnp.max(wei, axis=-1, keepdims=True)
        p = jnp.exp(wei - m)
        # approx reciprocal (EUP slot); ~2^-12 rel. error, negligible vs bf16 operands.
        p = p * pl.reciprocal(jnp.sum(p, axis=-1, keepdims=True), approx=True)
        oh = jnp.einsum("bts,bsd->btd", p.astype(bf16), vh,
                        preferred_element_type=f32)          # (bblk, seq, D)
        head_outs.append(oh.reshape(rows, HEAD_SIZE).astype(bf16))

    # Head concat + single K=64 output projection (one MXU matmul instead of 4).
    concat = jnp.concatenate(head_outs, axis=-1)             # (rows, C) bf16
    sa = jnp.dot(concat, wproj_ref[...], preferred_element_type=f32) + bproj
    x1 = x + sa

    # ----- x = x + FeedForward(LayerNorm2(x)) -----
    h2 = _layer_norm(x1, ln2_g, ln2_b)
    ff = jnp.dot(h2.astype(bf16), w1_ref[...], preferred_element_type=f32) + b1
    ff = jnp.maximum(ff, 0.0)
    ff = jnp.dot(ff.astype(bf16), w2_ref[...], preferred_element_type=f32) + b2

    o_ref[...] = (x1 + ff).astype(o_ref.dtype)


def block_forward(x, packed, *, rows_per_step=4096):
    B, T, C = x.shape
    assert C == N_EMBD and T <= BLOCK_SIZE

    # Pad seq to a multiple of 16 (bf16 sublane tile) for clean tiling and
    # in-kernel reshapes; padded rows never influence real outputs (causal
    # mask keeps real queries on real keys; padded rows are sliced off).
    Tp = -(-T // 16) * 16
    # As many whole batch elements per grid step as fit the row budget
    # (4096 rows keeps f32 temporaries well inside v7x's 64 MiB VMEM).
    bblk = max(1, min(B, max(1, rows_per_step // Tp)))
    # Keep at least two grid steps when possible so v7x's 2 TensorCores both
    # get work on the "parallel" axis (negligible cost on 1-TC chips).
    if B >= 2 and -(-B // bblk) < 2:
        bblk = -(-B // 2)
    nblk = -(-B // bblk)
    Bp = nblk * bblk

    xp = x
    if (Bp, Tp) != (B, T):
        xp = jnp.pad(x, ((0, Bp - B), (0, Tp - T), (0, 0)))
    # bf16 HBM I/O: halves DMA traffic; all in-kernel math stays f32-accumulated.
    x2 = xp.reshape(Bp * Tp, C).astype(jnp.bfloat16)

    kernel = functools.partial(block_kernel, bblk=bblk, seq=Tp)

    out2 = pl.pallas_call(
        kernel,
        out_shape=jax.ShapeDtypeStruct((Bp * Tp, C), jnp.bfloat16),
        grid=(nblk,),
        in_specs=[
            pl.BlockSpec((bblk * Tp, C), lambda i: (i, 0)),
            pl.BlockSpec(packed["vecs"].shape, lambda i: (0, 0)),
            pl.BlockSpec(packed["b1"].shape, lambda i: (0, 0)),
            pl.BlockSpec(packed["wqkv"].shape, lambda i: (0, 0)),
            pl.BlockSpec(packed["wproj"].shape, lambda i: (0, 0)),
            pl.BlockSpec(packed["w1"].shape, lambda i: (0, 0)),
            pl.BlockSpec(packed["w2"].shape, lambda i: (0, 0)),
        ],
        out_specs=pl.BlockSpec((bblk * Tp, C), lambda i: (i, 0)),
        compiler_params=pltpu.CompilerParams(
            dimension_semantics=("parallel",),
            vmem_limit_bytes=64 * 1024 * 1024),
    )(x2, packed["vecs"], packed["b1"], packed["wqkv"],
      packed["wproj"], packed["w1"], packed["w2"])

    return out2.reshape(Bp, Tp, C)[:B, :T].astype(x.dtype)


# ----------------------------------------------------------------------------
# Pure-JAX f32 reference (same math as the PyTorch module) for a sanity check
# ----------------------------------------------------------------------------
def block_ref(x, params):
    def ln(z, g, b):
        mu = jnp.mean(z, axis=-1, keepdims=True)
        var = jnp.mean((z - mu) ** 2, axis=-1, keepdims=True)
        return (z - mu) / jnp.sqrt(var + LN_EPS) * g + b

    B, T, C = x.shape
    h = ln(x, params["ln1_g"], params["ln1_b"])
    q = h @ params["wq"].T
    k = h @ params["wk"].T
    v = h @ params["wv"].T
    mask = jnp.tril(jnp.ones((T, T), bool))
    scale = float(N_EMBD) ** -0.5
    outs = []
    for hh in range(N_HEAD):
        sl = slice(hh * HEAD_SIZE, (hh + 1) * HEAD_SIZE)
        wei = jnp.einsum("btd,bsd->bts", q[..., sl], k[..., sl]) * scale
        wei = jnp.where(mask, wei, -jnp.inf)
        wei = jax.nn.softmax(wei, axis=-1)
        outs.append(jnp.einsum("bts,bsd->btd", wei, v[..., sl]))
    sa = jnp.concatenate(outs, axis=-1) @ params["wproj"].T + params["bproj"]
    x1 = x + sa
    h2 = ln(x1, params["ln2_g"], params["ln2_b"])
    ff = jnp.maximum(h2 @ params["w1"].T + params["b1"], 0.0)
    ff = ff @ params["w2"].T + params["b2"]
    return x1 + ff


if __name__ == "__main__":
    key = jax.random.PRNGKey(0)
    kx, kp = jax.random.split(key)

    B, T = 2, 8
    x = jax.random.normal(kx, (B, T, N_EMBD), jnp.float32)
    params = init_block_params(kp)
    packed = pack_params(params)

    out = jax.block_until_ready(block_forward(x, packed))
    ref = block_ref(x, params)

    assert out.shape == (B, T, N_EMBD)
    # bf16 HBM I/O + bf16 matmul operands (f32 accumulation) vs. pure-f32 reference.
    err = float(jnp.max(jnp.abs(out - ref)))
    assert err < 1e-1, f"max abs error {err}"
    print("KERNEL_OK")
</pallas_src>

<mosaic_0001>
module attributes {stable_mosaic.version = 11 : i64} {
  func.func @block_kernel(%arg0: i32, %arg1: memref<16x64xbf16, #tpu.memory_space<vmem>>, %arg2: memref<8x64xf32, #tpu.memory_space<vmem>>, %arg3: memref<1x256xf32, #tpu.memory_space<vmem>>, %arg4: memref<64x192xbf16, #tpu.memory_space<vmem>>, %arg5: memref<64x64xbf16, #tpu.memory_space<vmem>>, %arg6: memref<64x256xbf16, #tpu.memory_space<vmem>>, %arg7: memref<256x64xbf16, #tpu.memory_space<vmem>>, %arg8: memref<16x64xbf16, #tpu.memory_space<vmem>>) attributes {dimension_semantics = [#tpu.dimension_semantics<parallel>], iteration_bounds = array<i64: 2>, scalar_prefetch = 0 : i64, scratch_operands = 0 : i64, tpu.core_type = #tpu.core_type<tc>, window_params = [{transform_indices = @transform_0, window_bounds = array<i64: 16, 64>}, {pipeline_mode = #tpu.pipeline_mode<synchronous>, transform_indices = @transform_1, window_bounds = array<i64: 8, 64>}, {pipeline_mode = #tpu.pipeline_mode<synchronous>, transform_indices = @transform_2, window_bounds = array<i64: 1, 256>}, {pipeline_mode = #tpu.pipeline_mode<synchronous>, transform_indices = @transform_3, window_bounds = array<i64: 64, 192>}, {pipeline_mode = #tpu.pipeline_mode<synchronous>, transform_indices = @transform_4, window_bounds = array<i64: 64, 64>}, {pipeline_mode = #tpu.pipeline_mode<synchronous>, transform_indices = @transform_5, window_bounds = array<i64: 64, 256>}, {pipeline_mode = #tpu.pipeline_mode<synchronous>, transform_indices = @transform_6, window_bounds = array<i64: 256, 64>}, {transform_indices = @transform_7, window_bounds = array<i64: 16, 64>}]} {
    %c0 = arith.constant 0 : index
    %c0_0 = arith.constant 0 : index
    %0 = vector.load %arg1[%c0, %c0_0] : memref<16x64xbf16, #tpu.memory_space<vmem>>, vector<16x64xbf16>
    %1 = arith.extf %0 : vector<16x64xbf16> to vector<16x64xf32>
    %c0_1 = arith.constant 0 : index
    %c0_2 = arith.constant 0 : index
    %2 = vector.load %arg2[%c0_1, %c0_2] : memref<8x64xf32, #tpu.memory_space<vmem>>, vector<8x64xf32>
    %3 = vector.extract_strided_slice %2 {offsets = [0, 0], sizes = [1, 64], strides = [1, 1]} : vector<8x64xf32> to vector<1x64xf32>
    %4 = vector.extract_strided_slice %2 {offsets = [1, 0], sizes = [1, 64], strides = [1, 1]} : vector<8x64xf32> to vector<1x64xf32>
    %5 = vector.extract_strided_slice %2 {offsets = [2, 0], sizes = [1, 64], strides = [1, 1]} : vector<8x64xf32> to vector<1x64xf32>
    %6 = vector.extract_strided_slice %2 {offsets = [3, 0], sizes = [1, 64], strides = [1, 1]} : vector<8x64xf32> to vector<1x64xf32>
    %7 = vector.extract_strided_slice %2 {offsets = [4, 0], sizes = [1, 64], strides = [1, 1]} : vector<8x64xf32> to vector<1x64xf32>
    %8 = vector.extract_strided_slice %2 {offsets = [5, 0], sizes = [1, 64], strides = [1, 1]} : vector<8x64xf32> to vector<1x64xf32>
    %c0_3 = arith.constant 0 : index
    %c0_4 = arith.constant 0 : index
    %9 = vector.load %arg3[%c0_3, %c0_4] : memref<1x256xf32, #tpu.memory_space<vmem>>, vector<1x256xf32>
    %cst = arith.constant dense<0.000000e+00> : vector<16xf32>
    %10 = vector.multi_reduction <add>, %1, %cst [1] : vector<16x64xf32> to vector<16xf32>
    %11 = vector.shape_cast %10 : vector<16xf32> to vector<16x1xf32>
    %cst_5 = arith.constant 6.400000e+01 : f32
    %12 = vector.broadcast %cst_5 : f32 to vector<16x1xf32>
    %13 = arith.divf %11, %12 : vector<16x1xf32>
    %14 = vector.broadcast %13 : vector<16x1xf32> to vector<16x64xf32>
    %15 = arith.subf %1, %14 : vector<16x64xf32>
    %16 = arith.mulf %15, %15 : vector<16x64xf32>
    %cst_6 = arith.constant dense<0.000000e+00> : vector<16xf32>
    %17 = vector.multi_reduction <add>, %16, %cst_6 [1] : vector<16x64xf32> to vector<16xf32>
    %18 = vector.shape_cast %17 : vector<16xf32> to vector<16x1xf32>
    %cst_7 = arith.constant 6.400000e+01 : f32
    %19 = vector.broadcast %cst_7 : f32 to vector<16x1xf32>
    %20 = arith.divf %18, %19 : vector<16x1xf32>
    %21 = vector.broadcast %13 : vector<16x1xf32> to vector<16x64xf32>
    %22 = arith.subf %1, %21 : vector<16x64xf32>
    %cst_8 = arith.constant 9.99999974E-6 : f32
    %23 = vector.broadcast %cst_8 : f32 to vector<16x1xf32>
    %24 = arith.addf %20, %23 : vector<16x1xf32>
    %25 = math.rsqrt %24 : vector<16x1xf32>
    %26 = vector.broadcast %25 : vector<16x1xf32> to vector<16x64xf32>
    %27 = arith.mulf %22, %26 : vector<16x64xf32>
    %28 = vector.broadcast %3 : vector<1x64xf32> to vector<16x64xf32>
    %29 = arith.mulf %27, %28 : vector<16x64xf32>
    %30 = vector.broadcast %4 : vector<1x64xf32> to vector<16x64xf32>
    %31 = arith.addf %29, %30 : vector<16x64xf32>
    %32 = arith.truncf %31 : vector<16x64xf32> to vector<16x64xbf16>
    %c0_9 = arith.constant 0 : index
    %c0_10 = arith.constant 0 : index
    %33 = vector.load %arg4[%c0_9, %c0_10] : memref<64x192xbf16, #tpu.memory_space<vmem>>, vector<64x192xbf16>
    %cst_11 = arith.constant dense<0.000000e+00> : vector<16x192xf32>
    %34 = tpu.matmul %32, %33, %cst_11 {dimension_numbers = #tpu.dot_dimension_numbers<[1], [0], [0], [1], [0, 0, 1, 1], [], []>} : vector<16x64xbf16>, vector<64x192xbf16>, vector<16x192xf32> -> vector<16x192xf32>
    %35 = tpu.iota {dimensions = array<i32: 0>} : vector<16x16xi32>
    %36 = tpu.iota {dimensions = array<i32: 1>} : vector<16x16xi32>
    %37 = arith.cmpi sle, %36, %35 : vector<16x16xi32>
    %38 = vector.shape_cast %37 : vector<16x16xi1> to vector<1x16x16xi1>
    %39 = vector.extract_strided_slice %34 {offsets = [0, 0], sizes = [16, 16], strides = [1, 1]} : vector<16x192xf32> to vector<16x16xf32>
    %40 = vector.shape_cast %39 : vector<16x16xf32> to vector<1x16x16xf32>
    %41 = arith.truncf %40 : vector<1x16x16xf32> to vector<1x16x16xbf16>
    %42 = vector.extract_strided_slice %34 {offsets = [0, 64], sizes = [16, 16], strides = [1, 1]} : vector<16x192xf32> to vector<16x16xf32>
    %43 = vector.shape_cast %42 : vector<16x16xf32> to vector<1x16x16xf32>
    %44 = arith.truncf %43 : vector<1x16x16xf32> to vector<1x16x16xbf16>
    %45 = vector.extract_strided_slice %34 {offsets = [0, 128], sizes = [16, 16], strides = [1, 1]} : vector<16x192xf32> to vector<16x16xf32>
    %46 = vector.shape_cast %45 : vector<16x16xf32> to vector<1x16x16xf32>
    %47 = arith.truncf %46 : vector<1x16x16xf32> to vector<1x16x16xbf16>
    "tpu.trace_start"() <{level = 10 : i32, message = "btd,bsd->bts"}> : () -> ()
    %cst_12 = arith.constant dense<0.000000e+00> : vector<1x16x16xf32>
    %48 = tpu.matmul %41, %44, %cst_12 {dimension_numbers = #tpu.dot_dimension_numbers<[2], [2], [1], [1], [0, 0, 0, 1, 1, 1], [0], [0]>} : vector<1x16x16xbf16>, vector<1x16x16xbf16>, vector<1x16x16xf32> -> vector<1x16x16xf32>
    "tpu.trace_stop"() : () -> ()
    %cst_13 = arith.constant 1.250000e-01 : f32
    %49 = vector.broadcast %cst_13 : f32 to vector<1x16x16xf32>
    %50 = arith.mulf %48, %49 : vector<1x16x16xf32>
    %cst_14 = arith.constant -1.000000e+30 : f32
    %51 = vector.broadcast %cst_14 : f32 to vector<1x16x16xf32>
    %52 = arith.select %38, %50, %51 : vector<1x16x16xi1>, vector<1x16x16xf32>
    %cst_15 = arith.constant dense<0xFF800000> : vector<1x16xf32>
    %53 = vector.multi_reduction <maximumf>, %52, %cst_15 [2] : vector<1x16x16xf32> to vector<1x16xf32>
    %54 = vector.shape_cast %53 : vector<1x16xf32> to vector<1x16x1xf32>
    %55 = vector.broadcast %54 : vector<1x16x1xf32> to vector<1x16x16xf32>
    %56 = arith.subf %52, %55 : vector<1x16x16xf32>
    %57 = math.exp %56 : vector<1x16x16xf32>
    %cst_16 = arith.constant dense<0.000000e+00> : vector<1x16xf32>
    %58 = vector.multi_reduction <add>, %57, %cst_16 [2] : vector<1x16x16xf32> to vector<1x16xf32>
    %59 = vector.shape_cast %58 : vector<1x16xf32> to vector<1x16x1xf32>
    %60 = tpu.reciprocal %59 {approx = true} : vector<1x16x1xf32> -> vector<1x16x1xf32>
    %61 = vector.broadcast %60 : vector<1x16x1xf32> to vector<1x16x16xf32>
    %62 = arith.mulf %57, %61 : vector<1x16x16xf32>
    %63 = arith.truncf %62 : vector<1x16x16xf32> to vector<1x16x16xbf16>
    "tpu.trace_start"() <{level = 10 : i32, message = "bts,bsd->btd"}> : () -> ()
    %cst_17 = arith.constant dense<0.000000e+00> : vector<1x16x16xf32>
    %64 = tpu.matmul %63, %47, %cst_17 {dimension_numbers = #tpu.dot_dimension_numbers<[2], [1], [1], [2], [0, 0, 0, 1, 1, 2], [0], [0]>} : vector<1x16x16xbf16>, vector<1x16x16xbf16>, vector<1x16x16xf32> -> vector<1x16x16xf32>
    "tpu.trace_stop"() : () -> ()
    %65 = vector.shape_cast %64 : vector<1x16x16xf32> to vector<16x16xf32>
    %66 = arith.truncf %65 : vector<16x16xf32> to vector<16x16xbf16>
    %67 = vector.extract_strided_slice %34 {offsets = [0, 16], sizes = [16, 16], strides = [1, 1]} : vector<16x192xf32> to vector<16x16xf32>
    %68 = vector.shape_cast %67 : vector<16x16xf32> to vector<1x16x16xf32>
    %69 = arith.truncf %68 : vector<1x16x16xf32> to vector<1x16x16xbf16>
    %70 = vector.extract_strided_slice %34 {offsets = [0, 80], sizes = [16, 16], strides = [1, 1]} : vector<16x192xf32> to vector<16x16xf32>
    %71 = vector.shape_cast %70 : vector<16x16xf32> to vector<1x16x16xf32>
    %72 = arith.truncf %71 : vector<1x16x16xf32> to vector<1x16x16xbf16>
    %73 = vector.extract_strided_slice %34 {offsets = [0, 144], sizes = [16, 16], strides = [1, 1]} : vector<16x192xf32> to vector<16x16xf32>
    %74 = vector.shape_cast %73 : vector<16x16xf32> to vector<1x16x16xf32>
    %75 = arith.truncf %74 : vector<1x16x16xf32> to vector<1x16x16xbf16>
    "tpu.trace_start"() <{level = 10 : i32, message = "btd,bsd->bts"}> : () -> ()
    %cst_18 = arith.constant dense<0.000000e+00> : vector<1x16x16xf32>
    %76 = tpu.matmul %69, %72, %cst_18 {dimension_numbers = #tpu.dot_dimension_numbers<[2], [2], [1], [1], [0, 0, 0, 1, 1, 1], [0], [0]>} : vector<1x16x16xbf16>, vector<1x16x16xbf16>, vector<1x16x16xf32> -> vector<1x16x16xf32>
    "tpu.trace_stop"() : () -> ()
    %cst_19 = arith.constant 1.250000e-01 : f32
    %77 = vector.broadcast %cst_19 : f32 to vector<1x16x16xf32>
    %78 = arith.mulf %76, %77 : vector<1x16x16xf32>
    %cst_20 = arith.constant -1.000000e+30 : f32
    %79 = vector.broadcast %cst_20 : f32 to vector<1x16x16xf32>
    %80 = arith.select %38, %78, %79 : vector<1x16x16xi1>, vector<1x16x16xf32>
    %cst_21 = arith.constant dense<0xFF800000> : vector<1x16xf32>
    %81 = vector.multi_reduction <maximumf>, %80, %cst_21 [2] : vector<1x16x16xf32> to vector<1x16xf32>
    %82 = vector.shape_cast %81 : vector<1x16xf32> to vector<1x16x1xf32>
    %83 = vector.broadcast %82 : vector<1x16x1xf32> to vector<1x16x16xf32>
    %84 = arith.subf %80, %83 : vector<1x16x16xf32>
    %85 = math.exp %84 : vector<1x16x16xf32>
    %cst_22 = arith.constant dense<0.000000e+00> : vector<1x16xf32>
    %86 = vector.multi_reduction <add>, %85, %cst_22 [2] : vector<1x16x16xf32> to vector<1x16xf32>
    %87 = vector.shape_cast %86 : vector<1x16xf32> to vector<1x16x1xf32>
    %88 = tpu.reciprocal %87 {approx = true} : vector<1x16x1xf32> -> vector<1x16x1xf32>
    %89 = vector.broadcast %88 : vector<1x16x1xf32> to vector<1x16x16xf32>
    %90 = arith.mulf %85, %89 : vector<1x16x16xf32>
    %91 = arith.truncf %90 : vector<1x16x16xf32> to vector<1x16x16xbf16>
    "tpu.trace_start"() <{level = 10 : i32, message = "bts,bsd->btd"}> : () -> ()
    %cst_23 = arith.constant dense<0.000000e+00> : vector<1x16x16xf32>
    %92 = tpu.matmul %91, %75, %cst_23 {dimension_numbers = #tpu.dot_dimension_numbers<[2], [1], [1], [2], [0, 0, 0, 1, 1, 2], [0], [0]>} : vector<1x16x16xbf16>, vector<1x16x16xbf16>, vector<1x16x16xf32> -> vector<1x16x16xf32>
    "tpu.trace_stop"() : () -> ()
    %93 = vector.shape_cast %92 : vector<1x16x16xf32> to vector<16x16xf32>
    %94 = arith.truncf %93 : vector<16x16xf32> to vector<16x16xbf16>
    %95 = vector.extract_strided_slice %34 {offsets = [0, 32], sizes = [16, 16], strides = [1, 1]} : vector<16x192xf32> to vector<16x16xf32>
    %96 = vector.shape_cast %95 : vector<16x16xf32> to vector<1x16x16xf32>
    %97 = arith.truncf %96 : vector<1x16x16xf32> to vector<1x16x16xbf16>
    %98 = vector.extract_strided_slice %34 {offsets = [0, 96], sizes = [16, 16], strides = [1, 1]} : vector<16x192xf32> to vector<16x16xf32>
    %99 = vector.shape_cast %98 : vector<16x16xf32> to vector<1x16x16xf32>
    %100 = arith.truncf %99 : vector<1x16x16xf32> to vector<1x16x16xbf16>
    %101 = vector.extract_strided_slice %34 {offsets = [0, 160], sizes = [16, 16], strides = [1, 1]} : vector<16x192xf32> to vector<16x16xf32>
    %102 = vector.shape_cast %101 : vector<16x16xf32> to vector<1x16x16xf32>
    %103 = arith.truncf %102 : vector<1x16x16xf32> to vector<1x16x16xbf16>
    "tpu.trace_start"() <{level = 10 : i32, message = "btd,bsd->bts"}> : () -> ()
    %cst_24 = arith.constant dense<0.000000e+00> : vector<1x16x16xf32>
    %104 = tpu.matmul %97, %100, %cst_24 {dimension_numbers = #tpu.dot_dimension_numbers<[2], [2], [1], [1], [0, 0, 0, 1, 1, 1], [0], [0]>} : vector<1x16x16xbf16>, vector<1x16x16xbf16>, vector<1x16x16xf32> -> vector<1x16x16xf32>
    "tpu.trace_stop"() : () -> ()
    %cst_25 = arith.constant 1.250000e-01 : f32
    %105 = vector.broadcast %cst_25 : f32 to vector<1x16x16xf32>
    %106 = arith.mulf %104, %105 : vector<1x16x16xf32>
    %cst_26 = arith.constant -1.000000e+30 : f32
    %107 = vector.broadcast %cst_26 : f32 to vector<1x16x16xf32>
    %108 = arith.select %38, %106, %107 : vector<1x16x16xi1>, vector<1x16x16xf32>
    %cst_27 = arith.constant dense<0xFF800000> : vector<1x16xf32>
    %109 = vector.multi_reduction <maximumf>, %108, %cst_27 [2] : vector<1x16x16xf32> to vector<1x16xf32>
    %110 = vector.shape_cast %109 : vector<1x16xf32> to vector<1x16x1xf32>
    %111 = vector.broadcast %110 : vector<1x16x1xf32> to vector<1x16x16xf32>
    %112 = arith.subf %108, %111 : vector<1x16x16xf32>
    %113 = math.exp %112 : vector<1x16x16xf32>
    %cst_28 = arith.constant dense<0.000000e+00> : vector<1x16xf32>
    %114 = vector.multi_reduction <add>, %113, %cst_28 [2] : vector<1x16x16xf32> to vector<1x16xf32>
    %115 = vector.shape_cast %114 : vector<1x16xf32> to vector<1x16x1xf32>
    %116 = tpu.reciprocal %115 {approx = true} : vector<1x16x1xf32> -> vector<1x16x1xf32>
    %117 = vector.broadcast %116 : vector<1x16x1xf32> to vector<1x16x16xf32>
    %118 = arith.mulf %113, %117 : vector<1x16x16xf32>
    %119 = arith.truncf %118 : vector<1x16x16xf32> to vector<1x16x16xbf16>
    "tpu.trace_start"() <{level = 10 : i32, message = "bts,bsd->btd"}> : () -> ()
    %cst_29 = arith.constant dense<0.000000e+00> : vector<1x16x16xf32>
    %120 = tpu.matmul %119, %103, %cst_29 {dimension_numbers = #tpu.dot_dimension_numbers<[2], [1], [1], [2], [0, 0, 0, 1, 1, 2], [0], [0]>} : vector<1x16x16xbf16>, vector<1x16x16xbf16>, vector<1x16x16xf32> -> vector<1x16x16xf32>
    "tpu.trace_stop"() : () -> ()
    %121 = vector.shape_cast %120 : vector<1x16x16xf32> to vector<16x16xf32>
    %122 = arith.truncf %121 : vector<16x16xf32> to vector<16x16xbf16>
    %123 = vector.extract_strided_slice %34 {offsets = [0, 48], sizes = [16, 16], strides = [1, 1]} : vector<16x192xf32> to vector<16x16xf32>
    %124 = vector.shape_cast %123 : vector<16x16xf32> to vector<1x16x16xf32>
    %125 = arith.truncf %124 : vector<1x16x16xf32> to vector<1x16x16xbf16>
    %126 = vector.extract_strided_slice %34 {offsets = [0, 112], sizes = [16, 16], strides = [1, 1]} : vector<16x192xf32> to vector<16x16xf32>
    %127 = vector.shape_cast %126 : vector<16x16xf32> to vector<1x16x16xf32>
    %128 = arith.truncf %127 : vector<1x16x16xf32> to vector<1x16x16xbf16>
    %129 = vector.extract_strided_slice %34 {offsets = [0, 176], sizes = [16, 16], strides = [1, 1]} : vector<16x192xf32> to vector<16x16xf32>
    %130 = vector.shape_cast %129 : vector<16x16xf32> to vector<1x16x16xf32>
    %131 = arith.truncf %130 : vector<1x16x16xf32> to vector<1x16x16xbf16>
    "tpu.trace_start"() <{level = 10 : i32, message = "btd,bsd->bts"}> : () -> ()
    %cst_30 = arith.constant dense<0.000000e+00> : vector<1x16x16xf32>
    %132 = tpu.matmul %125, %128, %cst_30 {dimension_numbers = #tpu.dot_dimension_numbers<[2], [2], [1], [1], [0, 0, 0, 1, 1, 1], [0], [0]>} : vector<1x16x16xbf16>, vector<1x16x16xbf16>, vector<1x16x16xf32> -> vector<1x16x16xf32>
    "tpu.trace_stop"() : () -> ()
    %cst_31 = arith.constant 1.250000e-01 : f32
    %133 = vector.broadcast %cst_31 : f32 to vector<1x16x16xf32>
    %134 = arith.mulf %132, %133 : vector<1x16x16xf32>
    %cst_32 = arith.constant -1.000000e+30 : f32
    %135 = vector.broadcast %cst_32 : f32 to vector<1x16x16xf32>
    %136 = arith.select %38, %134, %135 : vector<1x16x16xi1>, vector<1x16x16xf32>
    %cst_33 = arith.constant dense<0xFF800000> : vector<1x16xf32>
    %137 = vector.multi_reduction <maximumf>, %136, %cst_33 [2] : vector<1x16x16xf32> to vector<1x16xf32>
    %138 = vector.shape_cast %137 : vector<1x16xf32> to vector<1x16x1xf32>
    %139 = vector.broadcast %138 : vector<1x16x1xf32> to vector<1x16x16xf32>
    %140 = arith.subf %136, %139 : vector<1x16x16xf32>
    %141 = math.exp %140 : vector<1x16x16xf32>
    %cst_34 = arith.constant dense<0.000000e+00> : vector<1x16xf32>
    %142 = vector.multi_reduction <add>, %141, %cst_34 [2] : vector<1x16x16xf32> to vector<1x16xf32>
    %143 = vector.shape_cast %142 : vector<1x16xf32> to vector<1x16x1xf32>
    %144 = tpu.reciprocal %143 {approx = true} : vector<1x16x1xf32> -> vector<1x16x1xf32>
    %145 = vector.broadcast %144 : vector<1x16x1xf32> to vector<1x16x16xf32>
    %146 = arith.mulf %141, %145 : vector<1x16x16xf32>
    %147 = arith.truncf %146 : vector<1x16x16xf32> to vector<1x16x16xbf16>
    "tpu.trace_start"() <{level = 10 : i32, message = "bts,bsd->btd"}> : () -> ()
    %cst_35 = arith.constant dense<0.000000e+00> : vector<1x16x16xf32>
    %148 = tpu.matmul %147, %131, %cst_35 {dimension_numbers = #tpu.dot_dimension_numbers<[2], [1], [1], [2], [0, 0, 0, 1, 1, 2], [0], [0]>} : vector<1x16x16xbf16>, vector<1x16x16xbf16>, vector<1x16x16xf32> -> vector<1x16x16xf32>
    "tpu.trace_stop"() : () -> ()
    %149 = vector.shape_cast %148 : vector<1x16x16xf32> to vector<16x16xf32>
    %150 = arith.truncf %149 : vector<16x16xf32> to vector<16x16xbf16>
    %151 = tpu.concatenate %66, %94, %122, %150 in 1 : vector<16x16xbf16>, vector<16x16xbf16>, vector<16x16xbf16>, vector<16x16xbf16> -> vector<16x64xbf16>
    %c0_36 = arith.constant 0 : index
    %c0_37 = arith.constant 0 : index
    %152 = vector.load %arg5[%c0_36, %c0_37] : memref<64x64xbf16, #tpu.memory_space<vmem>>, vector<64x64xbf16>
    %cst_38 = arith.constant dense<0.000000e+00> : vector<16x64xf32>
    %153 = tpu.matmul %151, %152, %cst_38 {dimension_numbers = #tpu.dot_dimension_numbers<[1], [0], [0], [1], [0, 0, 1, 1], [], []>} : vector<16x64xbf16>, vector<64x64xbf16>, vector<16x64xf32> -> vector<16x64xf32>
    %154 = vector.broadcast %7 : vector<1x64xf32> to vector<16x64xf32>
    %155 = arith.addf %153, %154 : vector<16x64xf32>
    %156 = arith.addf %1, %155 : vector<16x64xf32>
    %cst_39 = arith.constant dense<0.000000e+00> : vector<16xf32>
    %157 = vector.multi_reduction <add>, %156, %cst_39 [1] : vector<16x64xf32> to vector<16xf32>
    %158 = vector.shape_cast %157 : vector<16xf32> to vector<16x1xf32>
    %cst_40 = arith.constant 6.400000e+01 : f32
    %159 = vector.broadcast %cst_40 : f32 to vector<16x1xf32>
    %160 = arith.divf %158, %159 : vector<16x1xf32>
    %161 = vector.broadcast %160 : vector<16x1xf32> to vector<16x64xf32>
    %162 = arith.subf %156, %161 : vector<16x64xf32>
    %163 = arith.mulf %162, %162 : vector<16x64xf32>
    %cst_41 = arith.constant dense<0.000000e+00> : vector<16xf32>
    %164 = vector.multi_reduction <add>, %163, %cst_41 [1] : vector<16x64xf32> to vector<16xf32>
    %165 = vector.shape_cast %164 : vector<16xf32> to vector<16x1xf32>
    %cst_42 = arith.constant 6.400000e+01 : f32
    %166 = vector.broadcast %cst_42 : f32 to vector<16x1xf32>
    %167 = arith.divf %165, %166 : vector<16x1xf32>
    %168 = vector.broadcast %160 : vector<16x1xf32> to vector<16x64xf32>
    %169 = arith.subf %156, %168 : vector<16x64xf32>
    %cst_43 = arith.constant 9.99999974E-6 : f32
    %170 = vector.broadcast %cst_43 : f32 to vector<16x1xf32>
    %171 = arith.addf %167, %170 : vector<16x1xf32>
    %172 = math.rsqrt %171 : vector<16x1xf32>
    %173 = vector.broadcast %172 : vector<16x1xf32> to vector<16x64xf32>
    %174 = arith.mulf %169, %173 : vector<16x64xf32>
    %175 = vector.broadcast %5 : vector<1x64xf32> to vector<16x64xf32>
    %176 = arith.mulf %174, %175 : vector<16x64xf32>
    %177 = vector.broadcast %6 : vector<1x64xf32> to vector<16x64xf32>
    %178 = arith.addf %176, %177 : vector<16x64xf32>
    %179 = arith.truncf %178 : vector<16x64xf32> to vector<16x64xbf16>
    %c0_44 = arith.constant 0 : index
    %c0_45 = arith.constant 0 : index
    %180 = vector.load %arg6[%c0_44, %c0_45] : memref<64x256xbf16, #tpu.memory_space<vmem>>, vector<64x256xbf16>
    %cst_46 = arith.constant dense<0.000000e+00> : vector<16x256xf32>
    %181 = tpu.matmul %179, %180, %cst_46 {dimension_numbers = #tpu.dot_dimension_numbers<[1], [0], [0], [1], [0, 0, 1, 1], [], []>} : vector<16x64xbf16>, vector<64x256xbf16>, vector<16x256xf32> -> vector<16x256xf32>
    %182 = vector.broadcast %9 : vector<1x256xf32> to vector<16x256xf32>
    %183 = arith.addf %181, %182 : vector<16x256xf32>
    %cst_47 = arith.constant 0.000000e+00 : f32
    %184 = vector.broadcast %cst_47 : f32 to vector<16x256xf32>
    %185 = arith.maximumf %183, %184 : vector<16x256xf32>
    %186 = arith.truncf %185 : vector<16x256xf32> to vector<16x256xbf16>
    %c0_48 = arith.constant 0 : index
    %c0_49 = arith.constant 0 : index
    %187 = vector.load %arg7[%c0_48, %c0_49] : memref<256x64xbf16, #tpu.memory_space<vmem>>, vector<256x64xbf16>
    %cst_50 = arith.constant dense<0.000000e+00> : vector<16x64xf32>
    %188 = tpu.matmul %186, %187, %cst_50 {dimension_numbers = #tpu.dot_dimension_numbers<[1], [0], [0], [1], [0, 0, 1, 1], [], []>} : vector<16x256xbf16>, vector<256x64xbf16>, vector<16x64xf32> -> vector<16x64xf32>
    %189 = vector.broadcast %8 : vector<1x64xf32> to vector<16x64xf32>
    %190 = arith.addf %188, %189 : vector<16x64xf32>
    %191 = arith.addf %156, %190 : vector<16x64xf32>
    %192 = arith.truncf %191 : vector<16x64xf32> to vector<16x64xbf16>
    %c0_51 = arith.constant 0 : index
    %c0_52 = arith.constant 0 : index
    %193 = vector.load %arg8[%c0_51, %c0_52] : memref<16x64xbf16, #tpu.memory_space<vmem>>, vector<16x64xbf16>
    tpu.vector_store %arg8[%c0_51, %c0_52], %192 {strides = array<i32>} : memref<16x64xbf16, #tpu.memory_space<vmem>>, vector<16x64xbf16>,
    return
  }
  func.func @transform_0(%arg0: i32) -> (i32, i32) {
    %c0_i32 = arith.constant 0 : i32
    %c0_i32_0 = arith.constant 0 : i32
    return %arg0, %c0_i32 : i32, i32
  }
  func.func @transform_1(%arg0: i32) -> (i32, i32) {
    %c0_i32 = arith.constant 0 : i32
    %c0_i32_0 = arith.constant 0 : i32
    %c0_i32_1 = arith.constant 0 : i32
    return %c0_i32, %c0_i32_0 : i32, i32
  }
  func.func @transform_2(%arg0: i32) -> (i32, i32) {
    %c0_i32 = arith.constant 0 : i32
    %c0_i32_0 = arith.constant 0 : i32
    %c0_i32_1 = arith.constant 0 : i32
    return %c0_i32, %c0_i32_0 : i32, i32
  }
  func.func @transform_3(%arg0: i32) -> (i32, i32) {
    %c0_i32 = arith.constant 0 : i32
    %c0_i32_0 = arith.constant 0 : i32
    %c0_i32_1 = arith.constant 0 : i32
    return %c0_i32, %c0_i32_0 : i32, i32
  }
  func.func @transform_4(%arg0: i32) -> (i32, i32) {
    %c0_i32 = arith.constant 0 : i32
    %c0_i32_0 = arith.constant 0 : i32
    %c0_i32_1 = arith.constant 0 : i32
    return %c0_i32, %c0_i32_0 : i32, i32
  }
  func.func @transform_5(%arg0: i32) -> (i32, i32) {
    %c0_i32 = arith.constant 0 : i32
    %c0_i32_0 = arith.constant 0 : i32
    %c0_i32_1 = arith.constant 0 : i32
    return %c0_i32, %c0_i32_0 : i32, i32
  }
  func.func @transform_6(%arg0: i32) -> (i32, i32) {
    %c0_i32 = arith.constant 0 : i32
    %c0_i32_0 = arith.constant 0 : i32
    %c0_i32_1 = arith.constant 0 : i32
    return %c0_i32, %c0_i32_0 : i32, i32
  }
  func.func @transform_7(%arg0: i32) -> (i32, i32) {
    %c0_i32 = arith.constant 0 : i32
    %c0_i32_0 = arith.constant 0 : i32
    return %arg0, %c0_i32 : i32, i32
  }
}

</mosaic_0001>

<llo_original>
// kernel: tpu_custom_call.1
$region0: #{tpu_custom_call.1}
  #allocation0 [shape = 'u32[]', space=smem, size = 0x4, offset = 0x4, fixed_abs, tag = 'smem constant byte address 0x4 - core index']
  #allocation1 [shape = 'u32[144,128]{1,0:T(1,128)}', space=vmem, size = 0x12000, scoped, tag = 'internal scratch']
  %s0 = inlined_call_operand.hbm [shape: bf16[32,64], index: 0, kind: input, shape index: {}]
  %s1 = inlined_call_operand.hbm [shape: f32[8,64], index: 1, kind: input, shape index: {}]
  %s2 = inlined_call_operand.hbm [shape: f32[1,256], index: 2, kind: input, shape index: {}]
  %s3 = inlined_call_operand.hbm [shape: bf16[64,192], index: 3, kind: input, shape index: {}]
  %s4 = inlined_call_operand.hbm [shape: bf16[64,64], index: 4, kind: input, shape index: {}]
  %s5 = inlined_call_operand.hbm [shape: bf16[64,256], index: 5, kind: input, shape index: {}]
  %s6 = inlined_call_operand.hbm [shape: bf16[256,64], index: 6, kind: input, shape index: {}]
  %s7 = inlined_call_operand.hbm [shape: bf16[32,64], index: 7, kind: output, shape index: {}]
  %s8 = sld [smem:[#allocation0]]
  $region89: #{tpu_custom_call.1} parent=0
    _
  %s10 = ssub.s32 1, %s8
  %s11 = scalar_select 0, %s10, %s8
  $region1: #{tpu_custom_call.1} parent=0
    #allocation2 [shape = 'u8[8192]{0}', space=vmem, size = 0x2000, scoped, tag = 'input window, operand 0']
    #allocation3 [shape = 's32[2]{0}', space=sflag, size = 0x8, scoped, tag = 'scoped memory for tpu_custom_call.1']
    #allocation4 [shape = 's32[2]{0}', space=sflag, size = 0x8, scoped, tag = 'scoped memory for tpu_custom_call.1']
    #allocation5 [shape = 'u8[4096]{0}', space=vmem, size = 0x1000, scoped, tag = 'input window, operand 1, single buffered']
    #allocation6 [shape = 's32[1]{0}', space=sflag, size = 0x4, scoped, tag = 'scoped memory for tpu_custom_call.1']
    #allocation7 [shape = 'u8[1024]{0}', space=vmem, size = 0x400, scoped, tag = 'input window, operand 2, single buffered']
    #allocation8 [shape = 'u8[32768]{0}', space=vmem, size = 0x8000, scoped, tag = 'input window, operand 3, single buffered']
    #allocation9 [shape = 's32[1]{0}', space=sflag, size = 0x4, scoped, tag = 'scoped memory for tpu_custom_call.1']
    #allocation10 [shape = 'u8[16384]{0}', space=vmem, size = 0x4000, scoped, tag = 'input window, operand 4, single buffered']
    #allocation11 [shape = 'u8[32768]{0}', space=vmem, size = 0x8000, scoped, tag = 'input window, operand 5, single buffered']
    #allocation12 [shape = 's32[1]{0}', space=sflag, size = 0x4, scoped, tag = 'scoped memory for tpu_custom_call.1']
    #allocation13 [shape = 'u8[65536]{0}', space=vmem, size = 0x10000, scoped, tag = 'input window, operand 6, single buffered']
    #allocation14 [shape = 'u8[8192]{0}', space=vmem, size = 0x2000, scoped, tag = 'output window, operand 0']
    %12 = vsyncpa [#allocation3], 0
    %s13 = scalar_lea.sflag [#allocation3], 1
    %14 = vsyncpa %s13, 0
    %15 = vsyncpa [#allocation6], 0
    %16 = vsyncpa [#allocation9], 0
    %17 = vsyncpa [#allocation12], 0
    %18 = vsyncpa [#allocation4], 0
    %s19 = scalar_lea.sflag [#allocation4], 1
    %20 = vsyncpa %s19, 0
    loop: start=0, step=1, limit=4
    $region2: #{tpu_custom_call.1} parent=1 // loop_pre_header
      _
    $region3: #{tpu_custom_call.1} parent=1 // loop_header
      %s22 = sphi 0, %s26
      %p23 = scmp.ge.s32.totalorder %s22, 4
      %s32 = sphi 0, %s34
      %s35 = sphi 0, %s32
      %s36 = sphi 0, %s35
      %s52 = sphi 0, %s36
      %s56 = sphi 0, %s56
      %s58 = sphi 0, %s56
      %s59 = sphi 0, %s58
      %s73 = sphi 0, %s59
      %s77 = sphi 0, %s77
      %s79 = sphi 0, %s77
      %s80 = sphi 0, %s79
      %s94 = sphi 0, %s80
      %s98 = sphi 0, %s98
      %s100 = sphi 0, %s98
      %s101 = sphi 0, %s100
      %s115 = sphi 0, %s101
      %s119 = sphi 0, %s119
      %s121 = sphi 0, %s119
      %s122 = sphi 0, %s121
      %s136 = sphi 0, %s122
      %s140 = sphi 0, %s140
      %s142 = sphi 0, %s140
      %s143 = sphi 0, %s142
      %s157 = sphi 0, %s143
      %s161 = sphi 0, %s161
      %s163 = sphi 0, %s161
      %s164 = sphi 0, %s163
      %s178 = sphi 0, %s164
      %s184 = sphi 0, %s186
      %s187 = sphi 0, %s184
      %s188 = sphi 0, %s187
      %s204 = sphi 0, %s188
    $region4: #{tpu_custom_call.1} parent=1 // loop_header_branch
      %25 = sbr.rel (%p23) target = $region8
    $region5: #{tpu_custom_call.1} parent=1 // loop_body
      %s27 = ssub.s32 %s22, 1
      %s28 = ssub.s32 %s22, 2
      %s29 = sadd.s32 %s22, 1
      %s30 = ssub.s32 %s22, %s29
      %p31 = scmp.eq.s32.totalorder %s30, 0
      %s33 = sadd.s32 %s32, 1
      %s34 = scalar_select %p31, %s32, %s33
      %p37 = pneg %p31
      %p38 = scmp.eq.s32.totalorder %s22, 1
      %p39 = por %p37, %p38
      %p40 = scmp.ne.s32.totalorder %s32, %s35
      %p41 = scmp.eq.s32.totalorder %s22, 0
      %p42 = por %p40, %p41
      %p43 = scmp.ne.s32.totalorder %s32, %s35
      %p44 = scmp.eq.s32.totalorder %s27, 1
      %p45 = por %p43, %p44
      %p46 = scmp.ne.s32.totalorder %s35, %s36
      %p47 = scmp.eq.s32.totalorder %s27, 0
      %p48 = por %p46, %p47
      %p49 = scmp.ne.s32.totalorder %s35, %s36
      %p50 = scmp.eq.s32.totalorder %s28, 1
      %p51 = por %p49, %p50
      %p53 = scmp.ne.s32.totalorder %s36, %s52
      %p54 = scmp.eq.s32.totalorder %s28, 0
      %p55 = por %p53, %p54
      %s57 = sadd.s32 %s56, 1
      %p60 = scmp.eq.s32.totalorder %s22, 1
      %p61 = scmp.ne.s32.totalorder %s56, %s58
      %p62 = scmp.eq.s32.totalorder %s22, 0
      %p63 = por %p61, %p62
      %p64 = scmp.ne.s32.totalorder %s56, %s58
      %p65 = scmp.eq.s32.totalorder %s27, 1
      %p66 = por %p64, %p65
      %p67 = scmp.ne.s32.totalorder %s58, %s59
      %p68 = scmp.eq.s32.totalorder %s27, 0
      %p69 = por %p67, %p68
      %p70 = scmp.ne.s32.totalorder %s58, %s59
      %p71 = scmp.eq.s32.totalorder %s28, 1
      %p72 = por %p70, %p71
      %p74 = scmp.ne.s32.totalorder %s59, %s73
      %p75 = scmp.eq.s32.totalorder %s28, 0
      %p76 = por %p74, %p75
      %s78 = sadd.s32 %s77, 1
      %p81 = scmp.eq.s32.totalorder %s22, 1
      %p82 = scmp.ne.s32.totalorder %s77, %s79
      %p83 = scmp.eq.s32.totalorder %s22, 0
      %p84 = por %p82, %p83
      %p85 = scmp.ne.s32.totalorder %s77, %s79
      %p86 = scmp.eq.s32.totalorder %s27, 1
      %p87 = por %p85, %p86
      %p88 = scmp.ne.s32.totalorder %s79, %s80
      %p89 = scmp.eq.s32.totalorder %s27, 0
      %p90 = por %p88, %p89
      %p91 = scmp.ne.s32.totalorder %s79, %s80
      %p92 = scmp.eq.s32.totalorder %s28, 1
      %p93 = por %p91, %p92
      %p95 = scmp.ne.s32.totalorder %s80, %s94
      %p96 = scmp.eq.s32.totalorder %s28, 0
      %p97 = por %p95, %p96
      %s99 = sadd.s32 %s98, 1
      %p102 = scmp.eq.s32.totalorder %s22, 1
      %p103 = scmp.ne.s32.totalorder %s98, %s100
      %p104 = scmp.eq.s32.totalorder %s22, 0
      %p105 = por %p103, %p104
      %p106 = scmp.ne.s32.totalorder %s98, %s100
      %p107 = scmp.eq.s32.totalorder %s27, 1
      %p108 = por %p106, %p107
      %p109 = scmp.ne.s32.totalorder %s100, %s101
      %p110 = scmp.eq.s32.totalorder %s27, 0
      %p111 = por %p109, %p110
      %p112 = scmp.ne.s32.totalorder %s100, %s101
      %p113 = scmp.eq.s32.totalorder %s28, 1
      %p114 = por %p112, %p113
      %p116 = scmp.ne.s32.totalorder %s101, %s115
      %p117 = scmp.eq.s32.totalorder %s28, 0
      %p118 = por %p116, %p117
      %s120 = sadd.s32 %s119, 1
      %p123 = scmp.eq.s32.totalorder %s22, 1
      %p124 = scmp.ne.s32.totalorder %s119, %s121
      %p125 = scmp.eq.s32.totalorder %s22, 0
      %p126 = por %p124, %p125
      %p127 = scmp.ne.s32.totalorder %s119, %s121
      %p128 = scmp.eq.s32.totalorder %s27, 1
      %p129 = por %p127, %p128
      %p130 = scmp.ne.s32.totalorder %s121, %s122
      %p131 = scmp.eq.s32.totalorder %s27, 0
      %p132 = por %p130, %p131
      %p133 = scmp.ne.s32.totalorder %s121, %s122
      %p134 = scmp.eq.s32.totalorder %s28, 1
      %p135 = por %p133, %p134
      %p137 = scmp.ne.s32.totalorder %s122, %s136
      %p138 = scmp.eq.s32.totalorder %s28, 0
      %p139 = por %p137, %p138
      %s141 = sadd.s32 %s140, 1
      %p144 = scmp.eq.s32.totalorder %s22, 1
      %p145 = scmp.ne.s32.totalorder %s140, %s142
      %p146 = scmp.eq.s32.totalorder %s22, 0
      %p147 = por %p145, %p146
      %p148 = scmp.ne.s32.totalorder %s140, %s142
      %p149 = scmp.eq.s32.totalorder %s27, 1
      %p150 = por %p148, %p149
      %p151 = scmp.ne.s32.totalorder %s142, %s143
      %p152 = scmp.eq.s32.totalorder %s27, 0
      %p153 = por %p151, %p152
      %p154 = scmp.ne.s32.totalorder %s142, %s143
      %p155 = scmp.eq.s32.totalorder %s28, 1
      %p156 = por %p154, %p155
      %p158 = scmp.ne.s32.totalorder %s143, %s157
      %p159 = scmp.eq.s32.totalorder %s28, 0
      %p160 = por %p158, %p159
      %s162 = sadd.s32 %s161, 1
      %p165 = scmp.eq.s32.totalorder %s22, 1
      %p166 = scmp.ne.s32.totalorder %s161, %s163
      %p167 = scmp.eq.s32.totalorder %s22, 0
      %p168 = por %p166, %p167
      %p169 = scmp.ne.s32.totalorder %s161, %s163
      %p170 = scmp.eq.s32.totalorder %s27, 1
      %p171 = por %p169, %p170
      %p172 = scmp.ne.s32.totalorder %s163, %s164
      %p173 = scmp.eq.s32.totalorder %s27, 0
      %p174 = por %p172, %p173
      %p175 = scmp.ne.s32.totalorder %s163, %s164
      %p176 = scmp.eq.s32.totalorder %s28, 1
      %p177 = por %p175, %p176
      %p179 = scmp.ne.s32.totalorder %s164, %s178
      %p180 = scmp.eq.s32.totalorder %s28, 0
      %p181 = por %p179, %p180
      %s182 = ssub.s32 %s22, %s29
      %p183 = scmp.eq.s32.totalorder %s182, 0
      %s185 = sadd.s32 %s184, 1
      %s186 = scalar_select %p183, %s184, %s185
      %p189 = pneg %p183
      %p190 = scmp.eq.s32.totalorder %s22, 1
      %p191 = por %p189, %p190
      %p192 = scmp.ne.s32.totalorder %s184, %s187
      %p193 = scmp.eq.s32.totalorder %s22, 0
      %p194 = por %p192, %p193
      %p195 = scmp.ne.s32.totalorder %s184, %s187
      %p196 = scmp.eq.s32.totalorder %s27, 1
      %p197 = por %p195, %p196
      %p198 = scmp.ne.s32.totalorder %s187, %s188
      %p199 = scmp.eq.s32.totalorder %s27, 0
      %p200 = por %p198, %p199
      %p201 = scmp.ne.s32.totalorder %s187, %s188
      %p202 = scmp.eq.s32.totalorder %s28, 1
      %p203 = por %p201, %p202
      %p205 = scmp.ne.s32.totalorder %s188, %s204
      %p206 = scmp.eq.s32.totalorder %s28, 0
      %p207 = por %p205, %p206
      %p208 = scmp.le.s32.totalorder 1, %s22
      %p209 = scmp.lt.s32.totalorder %s22, 3
      %p210 = pnand %p208, %p209
      %p211 = pneg %p210
      // Predicated region
      $region9: #{tpu_custom_call.1} parent=5 // pred_check
        _
      $region10: #{tpu_custom_call.1} parent=5 // pred_check_branch
        %213 = sbr.rel (%p210) target = $region12
      $region11: #{tpu_custom_call.1} parent=5 // pred_region
        %s214 = ssub.s32 %s22, 1
        // Predicated region
        $region13: #{tpu_custom_call.1} parent=11 // pred_check
          %p215 = pneg %p69
        $region14: #{tpu_custom_call.1} parent=11 // pred_check_branch
          %217 = sbr.rel (%p215) target = $region16
        $region15: #{tpu_custom_call.1} parent=11 // pred_region
          %s219 = ssub.s32 128, 128
          %220 = vsyncadd [#allocation6], %s219
          %s222 = sshll.u32 [#allocation5], 4
          %s223 = int_to_ptr.vmem [resolvable:$true] %s222
          %225 = dma.hbm_to_vmem [thread:$0]  %s1, 128, %s223, [#allocation6]
        $region16: #{tpu_custom_call.1} parent=11 // pred_fallthru
          _
        // Predicated region
        $region17: #{tpu_custom_call.1} parent=11 // pred_check
          %p226 = pneg %p90
        $region18: #{tpu_custom_call.1} parent=11 // pred_check_branch
          %228 = sbr.rel (%p226) target = $region20
        $region19: #{tpu_custom_call.1} parent=11 // pred_region
          %s230 = ssub.s32 32, 32
          %231 = vsyncadd [#allocation6], %s230
          %s233 = sshll.u32 [#allocation7], 4
          %s234 = int_to_ptr.vmem [resolvable:$true] %s233
          %236 = dma.hbm_to_vmem [thread:$0]  %s2, 32, %s234, [#allocation6]
        $region20: #{tpu_custom_call.1} parent=11 // pred_fallthru
          _
        // Predicated region
        $region21: #{tpu_custom_call.1} parent=11 // pred_check
          %p237 = pneg %p111
        $region22: #{tpu_custom_call.1} parent=11 // pred_check_branch
          %239 = sbr.rel (%p237) target = $region24
        $region23: #{tpu_custom_call.1} parent=11 // pred_region
          %s241 = ssub.s32 1024, 1024
          %242 = vsyncadd [#allocation9], %s241
          %s243 = sshll.u32 [#allocation8], 4
          %s244 = int_to_ptr.vmem [resolvable:$true] %s243
          %249 = dma.hbm_to_vmem [thread:$0]  %s3, 1024, %s244, [#allocation9], 128, 128, 8
        $region24: #{tpu_custom_call.1} parent=11 // pred_fallthru
          _
        // Predicated region
        $region25: #{tpu_custom_call.1} parent=11 // pred_check
          %p250 = pneg %p132
        $region26: #{tpu_custom_call.1} parent=11 // pred_check_branch
          %252 = sbr.rel (%p250) target = $region28
        $region27: #{tpu_custom_call.1} parent=11 // pred_region
          %s254 = ssub.s32 512, 512
          %255 = vsyncadd [#allocation9], %s254
          %s256 = sshll.u32 [#allocation10], 4
          %s257 = int_to_ptr.vmem [resolvable:$true] %s256
          %262 = dma.hbm_to_vmem [thread:$0]  %s4, 512, %s257, [#allocation9], 64, 64, 4
        $region28: #{tpu_custom_call.1} parent=11 // pred_fallthru
          _
        // Predicated region
        $region29: #{tpu_custom_call.1} parent=11 // pred_check
          %p263 = pneg %p153
        $region30: #{tpu_custom_call.1} parent=11 // pred_check_branch
          %265 = sbr.rel (%p263) target = $region32
        $region31: #{tpu_custom_call.1} parent=11 // pred_region
          %s267 = ssub.s32 1024, 1024
          %268 = vsyncadd [#allocation12], %s267
          %s269 = sshll.u32 [#allocation11], 4
          %s270 = int_to_ptr.vmem [resolvable:$true] %s269
          %275 = dma.hbm_to_vmem [thread:$0]  %s5, 1024, %s270, [#allocation12], 128, 128, 8
        $region32: #{tpu_custom_call.1} parent=11 // pred_fallthru
          _
        // Predicated region
        $region33: #{tpu_custom_call.1} parent=11 // pred_check
          %p276 = pneg %p174
        $region34: #{tpu_custom_call.1} parent=11 // pred_check_branch
          %278 = sbr.rel (%p276) target = $region36
        $region35: #{tpu_custom_call.1} parent=11 // pred_region
          %s280 = ssub.s32 2048, 2048
          %281 = vsyncadd [#allocation12], %s280
          %s282 = sshll.u32 [#allocation13], 4
          %s283 = int_to_ptr.vmem [resolvable:$true] %s282
          %288 = dma.hbm_to_vmem [thread:$0]  %s6, 2048, %s283, [#allocation12], 64, 64, 4
        $region36: #{tpu_custom_call.1} parent=11 // pred_fallthru
          _
      $region12: #{tpu_custom_call.1} parent=5 // pred_fallthru
        _
      %p289 = scmp.lt.s32.totalorder %s22, 2
      // Predicated region
      $region37: #{tpu_custom_call.1} parent=5 // pred_check
        %p290 = pneg %p289
      $region38: #{tpu_custom_call.1} parent=5 // pred_check_branch
        %292 = sbr.rel (%p290) target = $region40
      $region39: #{tpu_custom_call.1} parent=5 // pred_region
        // Predicated region
        $region41: #{tpu_custom_call.1} parent=39 // pred_check
          %p293 = pneg %p42
        $region42: #{tpu_custom_call.1} parent=39 // pred_check_branch
          %295 = sbr.rel (%p293) target = $region44
        $region43: #{tpu_custom_call.1} parent=39 // pred_region
          %s296 = sand.u32 %s32, 1
          %s297 = scalar_lea.sflag [#allocation3], %s296
          %s298 = sand.u32 %s32, 1
          %s299 = smul.addr %s298, 8
          %s300 = scalar_lea.vmem [#allocation2], %s299
          %s301 = smul.u32 2, %s22
          %s303 = ssub.s32 128, 128
          %304 = vsyncadd %s297, %s303
          %s305 = smul.addr %s301, 64
          %s306 = scalar_lea.hbm %s0, %s305
          %s307 = sshll.u32 %s300, 4
          %s308 = int_to_ptr.vmem [resolvable:$true] %s307
          %313 = dma.hbm_to_vmem [thread:$0]  %s306, 128, %s308, %s297, 64, 64, 4
        $region44: #{tpu_custom_call.1} parent=39 // pred_fallthru
          _
      $region40: #{tpu_custom_call.1} parent=5 // pred_fallthru
        _
      %p314 = scmp.le.s32.totalorder 1, %s22
      %p315 = scmp.lt.s32.totalorder %s22, 3
      %p316 = pnand %p314, %p315
      %p317 = pneg %p316
      // Predicated region
      $region45: #{tpu_custom_call.1} parent=5 // pred_check
        _
      $region46: #{tpu_custom_call.1} parent=5 // pred_check_branch
        %319 = sbr.rel (%p316) target = $region48
      $region47: #{tpu_custom_call.1} parent=5 // pred_region
        %s320 = ssub.s32 %s22, 1
        %s321 = sand.u32 %s35, 1
        %s322 = scalar_lea.sflag [#allocation3], %s321
        %s323 = sand.u32 %s35, 1
        %s324 = smul.addr %s323, 8
        %s325 = scalar_lea.vmem [#allocation2], %s324
        // Predicated region
        $region49: #{tpu_custom_call.1} parent=47 // pred_check
          %p326 = pneg %p48
        $region50: #{tpu_custom_call.1} parent=47 // pred_check_branch
          %328 = sbr.rel (%p326) target = $region52
        $region51: #{tpu_custom_call.1} parent=47 // pred_region
          %329 = dma.done %s322, 128
        $region52: #{tpu_custom_call.1} parent=47 // pred_fallthru
          _
        // Predicated region
        $region53: #{tpu_custom_call.1} parent=47 // pred_check
          %p330 = pneg %p69
        $region54: #{tpu_custom_call.1} parent=47 // pred_check_branch
          %332 = sbr.rel (%p330) target = $region56
        $region55: #{tpu_custom_call.1} parent=47 // pred_region
          %333 = dma.done [#allocation6], 128
        $region56: #{tpu_custom_call.1} parent=47 // pred_fallthru
          _
        // Predicated region
        $region57: #{tpu_custom_call.1} parent=47 // pred_check
          %p334 = pneg %p90
        $region58: #{tpu_custom_call.1} parent=47 // pred_check_branch
          %336 = sbr.rel (%p334) target = $region60
        $region59: #{tpu_custom_call.1} parent=47 // pred_region
          %337 = dma.done [#allocation6], 32
        $region60: #{tpu_custom_call.1} parent=47 // pred_fallthru
          _
        // Predicated region
        $region61: #{tpu_custom_call.1} parent=47 // pred_check
          %p338 = pneg %p111
        $region62: #{tpu_custom_call.1} parent=47 // pred_check_branch
          %340 = sbr.rel (%p338) target = $region64
        $region63: #{tpu_custom_call.1} parent=47 // pred_region
          %341 = dma.done [#allocation9], 1024
        $region64: #{tpu_custom_call.1} parent=47 // pred_fallthru
          _
        // Predicated region
        $region65: #{tpu_custom_call.1} parent=47 // pred_check
          %p342 = pneg %p132
        $region66: #{tpu_custom_call.1} parent=47 // pred_check_branch
          %344 = sbr.rel (%p342) target = $region68
        $region67: #{tpu_custom_call.1} parent=47 // pred_region
          %345 = dma.done [#allocation9], 512
        $region68: #{tpu_custom_call.1} parent=47 // pred_fallthru
          _
        // Predicated region
        $region69: #{tpu_custom_call.1} parent=47 // pred_check
          %p346 = pneg %p153
        $region70: #{tpu_custom_call.1} parent=47 // pred_check_branch
          %348 = sbr.rel (%p346) target = $region72
        $region71: #{tpu_custom_call.1} parent=47 // pred_region
          %349 = dma.done [#allocation12], 1024
        $region72: #{tpu_custom_call.1} parent=47 // pred_fallthru
          _
        // Predicated region
        $region73: #{tpu_custom_call.1} parent=47 // pred_check
          %p350 = pneg %p174
        $region74: #{tpu_custom_call.1} parent=47 // pred_check_branch
          %352 = sbr.rel (%p350) target = $region76
        $region75: #{tpu_custom_call.1} parent=47 // pred_region
          %353 = dma.done [#allocation12], 2048
        $region76: #{tpu_custom_call.1} parent=47 // pred_fallthru
          _
        %s354 = sand.u32 %s35, 1
        %s355 = scalar_lea.sflag [#allocation3], %s354
        %s356 = sand.u32 %s35, 1
        %s357 = smul.addr %s356, 8
        %s358 = scalar_lea.vmem [#allocation2], %s357
        %p359 = pneg %p48
        %p360 = pneg %p45
        %p361 = pneg %p69
        %p362 = pneg %p66
        %p363 = pneg %p90
        %p364 = pneg %p87
        %p365 = pneg %p111
        %p366 = pneg %p108
        %p367 = pneg %p132
        %p368 = pneg %p129
        %p369 = pneg %p153
        %p370 = pneg %p150
        %p371 = pneg %p174
        %p372 = pneg %p171
        %p373 = pneg %p200
        %p374 = pneg %p197
        %s375 = sand.u32 %s187, 1
        %s376 = scalar_lea.sflag [#allocation4], %s375
        %s377 = sand.u32 %s187, 1
        %s378 = smul.addr %s377, 8
        %s379 = scalar_lea.vmem [#allocation14], %s378
        %s380 = smul.u32 2, %s27
        %s381 = smul.u32 2, %s27
        %v383 = vld [vmem:[%s325] sm:$0xf]
        %v384 = vld [vmem:[%s325 + $0x4] sm:$0xf]
        %v385 = vunpack.c.l.bf16 %v383
        %v386 = vunpack.c.l.bf16 %v384
        %v387 = vld [vmem:[#allocation5] sm:$0xff]
        %v388 = vld [vmem:[#allocation7] sm:$0x3]
        %vm389 = vcmask 523264
        %v390 = vsel %vm389, %v385, 0.0
        %391 = vadd.xlane.f32.xlu0 %v390
        %v392 = vpop.xlane.xlu0 %391
        %v393 = vsel %vm389, %v386, 0.0
        %394 = vadd.xlane.f32.xlu0 %v393
        %v395 = vpop.xlane.xlu0 %394
        %v396 = vrcp.pop 64.0
        %v397 = vmul.f32 %v392, %v396
        %v398 = vmul.f32 %v395, %v396
        %v399 = vsub.f32 %v385, %v397
        %v400 = vsub.f32 %v386, %v398
        %v401 = vmul.f32 %v399, %v399
        %v402 = vmul.f32 %v400, %v400
        %v403 = vsel %vm389, %v401, 0.0
        %404 = vadd.xlane.f32.xlu0 %v403
        %v405 = vpop.xlane.xlu0 %404
        %v406 = vsel %vm389, %v402, 0.0
        %407 = vadd.xlane.f32.xlu0 %v406
        %v408 = vpop.xlane.xlu0 %407
        %v409 = vmul.f32 %v405, %v396
        %v410 = vmul.f32 %v408, %v396
        %v411 = vadd.f32 %v409, 1e-05
        %v412 = vadd.f32 %v410, 1e-05
        %v413 = vrsqrt.pop %v411
        %v414 = vrsqrt.pop %v412
        %v415 = vmul.f32 %v399, %v413
        %v416 = vmul.f32 %v400, %v414
        %v417 = vlaneseq
        %v418 = vshrl.u32 %v417, 7
        %v419 = vsub.s32 0, %v418
        %v420 = vrot.slane %v387, %v419
        %v421 = vmul.f32 %v415, %v420
        %v422 = vmul.f32 %v416, %v420
        %v423 = vlaneseq
        %v424 = vshrl.u32 %v423, 7
        %v425 = vsub.s32 1, %v424
        %v426 = vrot.slane %v387, %v425
        %v427 = vadd.f32 %v421, %v426
        %v428 = vadd.f32 %v422, %v426
        %v429 = vpack.c.bf16 %v428, %v427
        %v430 = vld [vmem:[#allocation8] sm:$0xff]
        %v431 = vld [vmem:[#allocation8 + $0x8] sm:$0xff]
        %v432 = vld [vmem:[#allocation8 + $0x10] sm:$0xff]
        %v433 = vld [vmem:[#allocation8 + $0x18] sm:$0xff]
        %v434 = vld [vmem:[#allocation8 + $0x20] sm:$0xff]
        %v435 = vld [vmem:[#allocation8 + $0x28] sm:$0xff]
        %v436 = vld [vmem:[#allocation8 + $0x30] sm:$0xff]
        %v437 = vld [vmem:[#allocation8 + $0x38] sm:$0xff]
        %v446 = vunpack.c.l.b16 %v430
        %v447 = vunpack.c.h.b16 %v430
        %v448 = vunpack.c.l.b16 %v431
        %v449 = vunpack.c.h.b16 %v431
        %v450 = vunpack.c.l.b16 %v432
        %v451 = vunpack.c.h.b16 %v432
        %v452 = vunpack.c.l.b16 %v433
        %v453 = vunpack.c.h.b16 %v433
        %v454 = vunpack.c.l.b16 %v434
        %v455 = vunpack.c.h.b16 %v434
        %v456 = vunpack.c.l.b16 %v435
        %v457 = vunpack.c.h.b16 %v435
        %v458 = vunpack.c.l.b16 %v436
        %v459 = vunpack.c.h.b16 %v436
        %v460 = vunpack.c.l.b16 %v437
        %v461 = vunpack.c.h.b16 %v437
        %v462 = vpack.c.b16 %v448, %v446
        %v463 = vpack.c.b16 %v449, %v447
        %v464 = vpack.c.b16 %v452, %v450
        %v465 = vpack.c.b16 %v453, %v451
        %v466 = vpack.c.b16 %v456, %v454
        %v467 = vpack.c.b16 %v457, %v455
        %v468 = vpack.c.b16 %v460, %v458
        %v469 = vpack.c.b16 %v461, %v459
        %v479 = vsel %vm389, %v429, 0
        %481 = vmatprep.subr.bf16.mxu0 %v463
        %482 = vmatpush1.bf16.msra.mxu0 %v462
        %483 = vmatprep.subr.bf16.mxu0 %v465
        %484 = vmatpush1.bf16.msra.mxu0 %v464
        %485 = vmatprep.subr.bf16.mxu0 %v467
        %486 = vmatpush1.bf16.msra.mxu0 %v466
        %487 = vmatprep.subr.bf16.mxu0 %v469
        %488 = vmatpush1.bf16.msra.mxu0 %v468
        %489 = vmatprep.subr.bf16.mxu0 0
        %490 = vmatpush1.bf16.msra.mxu0 0
        %491 = vmatprep.subr.bf16.mxu0 0
        %492 = vmatpush1.bf16.msra.mxu0 0
        %493 = vmatprep.subr.bf16.mxu0 0
        %494 = vmatpush1.bf16.msra.mxu0 0
        %495 = vmatprep.subr.bf16.mxu0 0
        %496 = vmatpush1.bf16.msra.mxu0 0
        %497 = vmatprep.subr.bf16.mxu0 0
        %498 = vmatpush1.bf16.msra.mxu0 0
        %499 = vmatprep.subr.bf16.mxu0 0
        %500 = vmatpush1.bf16.msra.mxu0 0
        %501 = vmatprep.subr.bf16.mxu0 0
        %502 = vmatpush1.bf16.msra.mxu0 0
        %503 = vmatprep.subr.bf16.mxu0 0
        %504 = vmatpush1.bf16.msra.mxu0 0
        %505 = vmatprep.subr.bf16.mxu0 0
        %506 = vmatpush1.bf16.msra.mxu0 0
        %507 = vmatprep.subr.bf16.mxu0 0
        %508 = vmatpush1.bf16.msra.mxu0 0
        %509 = vmatprep.subr.bf16.mxu0 0
        %510 = vmatpush1.bf16.msra.mxu0 0
        %511 = vmatprep.subr.bf16.mxu0 0
        %512 = vmatpush1.bf16.msra.mxu0 0
        %513 = vmatprep.mubr.bf16.mxu0 0
        %514 = vmatmul.mubr.bf16.gmra.mrb[0].mxu0 %v479
        %v515 = vpop.f32.mrb[0].mxu0
        %v516 = vadd.f32 0.0, %v515
        %v517 = vpop.f32.mrb[0].mxu0
        %v518 = vadd.f32 0.0, %v517
        %v519 = vpop.f32.mrb[0].mxu0
        %v520 = vadd.f32 0.0, %v519
        %v521 = vpop.f32.mrb[0].mxu0
        %v522 = vadd.f32 0.0, %v521
        %523 = vdwg.mxu0
        %v524 = vlaneseq
        %v525 = vshrl.u32 %v524, 7
        %v526 = vadd.s32 %v525, 8
        %v527 = vlaneseq
        %v528 = vand.u32 %v527, 127
        %vm529 = vcmp.le.s32.totalorder %v528, %v525
        %vm530 = vcmp.le.s32.totalorder %v528, %v526
        %v531 = vpack.c.bf16 %v520, %v516
        %v532 = vpack.c.bf16 %v522, %v518
        %534 = vrot.lane.b32.xlu0 %v531, 64
        %v535 = vpop.permute.xlu0 %534
        %vm536 = vcmask 130048
        %v538 = vsel %vm536, %v531, 0
        %v541 = vsel %vm536, %v535, 0
        %543 = vmatprep.subr.bf16.mxu0 0
        %544 = vmatpush1.bf16.xpose.msra.mxu0 %v541
        %545 = vmatprep.subr.bf16.mxu0 0
        %546 = vmatpush1.bf16.xpose.msra.mxu0 0
        %547 = vmatprep.subr.bf16.mxu0 0
        %548 = vmatpush1.bf16.xpose.msra.mxu0 0
        %549 = vmatprep.subr.bf16.mxu0 0
        %550 = vmatpush1.bf16.xpose.msra.mxu0 0
        %551 = vmatprep.subr.bf16.mxu0 0
        %552 = vmatpush1.bf16.xpose.msra.mxu0 0
        %553 = vmatprep.subr.bf16.mxu0 0
        %554 = vmatpush1.bf16.xpose.msra.mxu0 0
        %555 = vmatprep.subr.bf16.mxu0 0
        %556 = vmatpush1.bf16.xpose.msra.mxu0 0
        %557 = vmatprep.subr.bf16.mxu0 0
        %558 = vmatpush1.bf16.xpose.msra.mxu0 0
        %559 = vmatprep.subr.bf16.mxu0 0
        %560 = vmatpush1.bf16.xpose.msra.mxu0 0
        %561 = vmatprep.subr.bf16.mxu0 0
        %562 = vmatpush1.bf16.xpose.msra.mxu0 0
        %563 = vmatprep.subr.bf16.mxu0 0
        %564 = vmatpush1.bf16.xpose.msra.mxu0 0
        %565 = vmatprep.subr.bf16.mxu0 0
        %566 = vmatpush1.bf16.xpose.msra.mxu0 0
        %567 = vmatprep.subr.bf16.mxu0 0
        %568 = vmatpush1.bf16.xpose.msra.mxu0 0
        %569 = vmatprep.subr.bf16.mxu0 0
        %570 = vmatpush1.bf16.xpose.msra.mxu0 0
        %571 = vmatprep.subr.bf16.mxu0 0
        %572 = vmatpush1.bf16.xpose.msra.mxu0 0
        %573 = vmatprep.subr.bf16.mxu0 0
        %574 = vmatpush1.bf16.xpose.msra.mxu0 0
        %575 = vmatprep.mubr.bf16.mxu0 0
        %576 = vmatmul.mubr.bf16.gmra.mrb[0].mxu0 %v538
        %v577 = vpop.f32.mrb[0].mxu0
        %v578 = vadd.f32 0.0, %v577
        %v579 = vpop.f32.mrb[0].mxu0
        %v580 = vpop.f32.mrb[0].mxu0
        %v581 = vadd.f32 0.0, %v580
        %v582 = vpop.f32.mrb[0].mxu0
        %583 = vdwg.mxu0
        %v584 = vmul.f32 %v578, 0.125
        %v585 = vmul.f32 %v581, 0.125
        %v586 = vsel %vm529, %v584, -1e+30
        %v587 = vsel %vm530, %v585, -1e+30
        %v588 = vsel %vm536, %v586, -inf
        %589 = vmax.xlane.f32.xlu0 %v588
        %v590 = vpop.xlane.xlu0 %589
        %v591 = vsel %vm536, %v587, -inf
        %592 = vmax.xlane.f32.xlu0 %v591
        %v593 = vpop.xlane.xlu0 %592
        %v594 = vsub.f32 %v586, %v590
        %v595 = vsub.f32 %v587, %v593
        %v596 = vmul.f32 %v594, 1.442695
        %v597 = vpow.pop %v596
        %v598 = vmul.f32 %v595, 1.442695
        %v599 = vpow.pop %v598
        %v600 = vsel %vm536, %v597, 0.0
        %601 = vadd.xlane.f32.xlu0 %v600
        %v602 = vpop.xlane.xlu0 %601
        %v603 = vsel %vm536, %v599, 0.0
        %604 = vadd.xlane.f32.xlu0 %v603
        %v605 = vpop.xlane.xlu0 %604
        %v606 = vrcp.pop %v602
        %v607 = vrcp.pop %v605
        %v608 = vmul.f32 %v597, %v606
        %v609 = vmul.f32 %v599, %v607
        %v610 = vpack.c.bf16 %v609, %v608
        %v612 = vsel %vm536, %v610, 0
        %614 = vmatprep.subr.bf16.mxu0 0
        %615 = vmatpush1.bf16.msra.mxu0 %v532
        %616 = vmatprep.subr.bf16.mxu0 0
        %617 = vmatpush1.bf16.msra.mxu0 0
        %618 = vmatprep.subr.bf16.mxu0 0
        %619 = vmatpush1.bf16.msra.mxu0 0
        %620 = vmatprep.subr.bf16.mxu0 0
        %621 = vmatpush1.bf16.msra.mxu0 0
        %622 = vmatprep.subr.bf16.mxu0 0
        %623 = vmatpush1.bf16.msra.mxu0 0
        %624 = vmatprep.subr.bf16.mxu0 0
        %625 = vmatpush1.bf16.msra.mxu0 0
        %626 = vmatprep.subr.bf16.mxu0 0
        %627 = vmatpush1.bf16.msra.mxu0 0
        %628 = vmatprep.subr.bf16.mxu0 0
        %629 = vmatpush1.bf16.msra.mxu0 0
        %630 = vmatprep.subr.bf16.mxu0 0
        %631 = vmatpush1.bf16.msra.mxu0 0
        %632 = vmatprep.subr.bf16.mxu0 0
        %633 = vmatpush1.bf16.msra.mxu0 0
        %634 = vmatprep.subr.bf16.mxu0 0
        %635 = vmatpush1.bf16.msra.mxu0 0
        %636 = vmatprep.subr.bf16.mxu0 0
        %637 = vmatpush1.bf16.msra.mxu0 0
        %638 = vmatprep.subr.bf16.mxu0 0
        %639 = vmatpush1.bf16.msra.mxu0 0
        %640 = vmatprep.subr.bf16.mxu0 0
        %641 = vmatpush1.bf16.msra.mxu0 0
        %642 = vmatprep.subr.bf16.mxu0 0
        %643 = vmatpush1.bf16.msra.mxu0 0
        %644 = vmatprep.subr.bf16.mxu0 0
        %645 = vmatpush1.bf16.msra.mxu0 0
        %646 = vmatprep.mubr.bf16.mxu0 0
        %647 = vmatmul.mubr.bf16.gmra.mrb[0].mxu0 %v612
        %v648 = vpop.f32.mrb[0].mxu0
        %v649 = vadd.f32 0.0, %v648
        %v650 = vpop.f32.mrb[0].mxu0
        %v651 = vpop.f32.mrb[0].mxu0
        %v652 = vadd.f32 0.0, %v651
        %v653 = vpop.f32.mrb[0].mxu0
        %654 = vdwg.mxu0
        %v655 = vpack.c.bf16 %v652, %v649
        %656 = vrot.lane.b32.xlu0 %v531, 112
        %v657 = vpop.permute.xlu0 %656
        %658 = vrot.lane.b32.xlu0 %v531, 48
        %v659 = vpop.permute.xlu0 %658
        %v661 = vsel %vm536, %v657, 0
        %v664 = vsel %vm536, %v659, 0
        %666 = vmatprep.subr.bf16.mxu0 0
        %667 = vmatpush1.bf16.xpose.msra.mxu0 %v664
        %668 = vmatprep.subr.bf16.mxu0 0
        %669 = vmatpush1.bf16.xpose.msra.mxu0 0
        %670 = vmatprep.subr.bf16.mxu0 0
        %671 = vmatpush1.bf16.xpose.msra.mxu0 0
        %672 = vmatprep.subr.bf16.mxu0 0
        %673 = vmatpush1.bf16.xpose.msra.mxu0 0
        %674 = vmatprep.subr.bf16.mxu0 0
        %675 = vmatpush1.bf16.xpose.msra.mxu0 0
        %676 = vmatprep.subr.bf16.mxu0 0
        %677 = vmatpush1.bf16.xpose.msra.mxu0 0
        %678 = vmatprep.subr.bf16.mxu0 0
        %679 = vmatpush1.bf16.xpose.msra.mxu0 0
        %680 = vmatprep.subr.bf16.mxu0 0
        %681 = vmatpush1.bf16.xpose.msra.mxu0 0
        %682 = vmatprep.subr.bf16.mxu0 0
        %683 = vmatpush1.bf16.xpose.msra.mxu0 0
        %684 = vmatprep.subr.bf16.mxu0 0
        %685 = vmatpush1.bf16.xpose.msra.mxu0 0
        %686 = vmatprep.subr.bf16.mxu0 0
        %687 = vmatpush1.bf16.xpose.msra.mxu0 0
        %688 = vmatprep.subr.bf16.mxu0 0
        %689 = vmatpush1.bf16.xpose.msra.mxu0 0
        %690 = vmatprep.subr.bf16.mxu0 0
        %691 = vmatpush1.bf16.xpose.msra.mxu0 0
        %692 = vmatprep.subr.bf16.mxu0 0
        %693 = vmatpush1.bf16.xpose.msra.mxu0 0
        %694 = vmatprep.subr.bf16.mxu0 0
        %695 = vmatpush1.bf16.xpose.msra.mxu0 0
        %696 = vmatprep.subr.bf16.mxu0 0
        %697 = vmatpush1.bf16.xpose.msra.mxu0 0
        %698 = vmatprep.mubr.bf16.mxu0 0
        %699 = vmatmul.mubr.bf16.gmra.mrb[0].mxu0 %v661
        %v700 = vpop.f32.mrb[0].mxu0
        %v701 = vadd.f32 0.0, %v700
        %v702 = vpop.f32.mrb[0].mxu0
        %v703 = vpop.f32.mrb[0].mxu0
        %v704 = vadd.f32 0.0, %v703
        %v705 = vpop.f32.mrb[0].mxu0
        %706 = vdwg.mxu0
        %v707 = vmul.f32 %v701, 0.125
        %v708 = vmul.f32 %v704, 0.125
        %v709 = vsel %vm529, %v707, -1e+30
        %v710 = vsel %vm530, %v708, -1e+30
        %v711 = vsel %vm536, %v709, -inf
        %712 = vmax.xlane.f32.xlu0 %v711
        %v713 = vpop.xlane.xlu0 %712
        %v714 = vsel %vm536, %v710, -inf
        %715 = vmax.xlane.f32.xlu0 %v714
        %v716 = vpop.xlane.xlu0 %715
        %v717 = vsub.f32 %v709, %v713
        %v718 = vsub.f32 %v710, %v716
        %v719 = vmul.f32 %v717, 1.442695
        %v720 = vpow.pop %v719
        %v721 = vmul.f32 %v718, 1.442695
        %v722 = vpow.pop %v721
        %v723 = vsel %vm536, %v720, 0.0
        %724 = vadd.xlane.f32.xlu0 %v723
        %v725 = vpop.xlane.xlu0 %724
        %v726 = vsel %vm536, %v722, 0.0
        %727 = vadd.xlane.f32.xlu0 %v726
        %v728 = vpop.xlane.xlu0 %727
        %v729 = vrcp.pop %v725
        %v730 = vrcp.pop %v728
        %v731 = vmul.f32 %v720, %v729
        %v732 = vmul.f32 %v722, %v730
        %v733 = vpack.c.bf16 %v732, %v731
        %735 = vrot.lane.b32.xlu0 %v532, 112
        %v736 = vpop.permute.xlu0 %735
        %v739 = vsel %vm536, %v733, 0
        %741 = vmatprep.subr.bf16.mxu0 0
        %742 = vmatpush1.bf16.msra.mxu0 %v736
        %743 = vmatprep.subr.bf16.mxu0 0
        %744 = vmatpush1.bf16.msra.mxu0 0
        %745 = vmatprep.subr.bf16.mxu0 0
        %746 = vmatpush1.bf16.msra.mxu0 0
        %747 = vmatprep.subr.bf16.mxu0 0
        %748 = vmatpush1.bf16.msra.mxu0 0
        %749 = vmatprep.subr.bf16.mxu0 0
        %750 = vmatpush1.bf16.msra.mxu0 0
        %751 = vmatprep.subr.bf16.mxu0 0
        %752 = vmatpush1.bf16.msra.mxu0 0
        %753 = vmatprep.subr.bf16.mxu0 0
        %754 = vmatpush1.bf16.msra.mxu0 0
        %755 = vmatprep.subr.bf16.mxu0 0
        %756 = vmatpush1.bf16.msra.mxu0 0
        %757 = vmatprep.subr.bf16.mxu0 0
        %758 = vmatpush1.bf16.msra.mxu0 0
        %759 = vmatprep.subr.bf16.mxu0 0
        %760 = vmatpush1.bf16.msra.mxu0 0
        %761 = vmatprep.subr.bf16.mxu0 0
        %762 = vmatpush1.bf16.msra.mxu0 0
        %763 = vmatprep.subr.bf16.mxu0 0
        %764 = vmatpush1.bf16.msra.mxu0 0
        %765 = vmatprep.subr.bf16.mxu0 0
        %766 = vmatpush1.bf16.msra.mxu0 0
        %767 = vmatprep.subr.bf16.mxu0 0
        %768 = vmatpush1.bf16.msra.mxu0 0
        %769 = vmatprep.subr.bf16.mxu0 0
        %770 = vmatpush1.bf16.msra.mxu0 0
        %771 = vmatprep.subr.bf16.mxu0 0
        %772 = vmatpush1.bf16.msra.mxu0 0
        %773 = vmatprep.mubr.bf16.mxu0 0
        %774 = vmatmul.mubr.bf16.gmra.mrb[0].mxu0 %v739
        %v775 = vpop.f32.mrb[0].mxu0
        %v776 = vadd.f32 0.0, %v775
        %v777 = vpop.f32.mrb[0].mxu0
        %v778 = vpop.f32.mrb[0].mxu0
        %v779 = vadd.f32 0.0, %v778
        %v780 = vpop.f32.mrb[0].mxu0
        %781 = vdwg.mxu0
        %v782 = vpack.c.bf16 %v779, %v776
        %783 = vrot.lane.b32.xlu0 %v531, 96
        %v784 = vpop.permute.xlu0 %783
        %785 = vrot.lane.b32.xlu0 %v531, 32
        %v786 = vpop.permute.xlu0 %785
        %v788 = vsel %vm536, %v784, 0
        %v791 = vsel %vm536, %v786, 0
        %793 = vmatprep.subr.bf16.mxu0 0
        %794 = vmatpush1.bf16.xpose.msra.mxu0 %v791
        %795 = vmatprep.subr.bf16.mxu0 0
        %796 = vmatpush1.bf16.xpose.msra.mxu0 0
        %797 = vmatprep.subr.bf16.mxu0 0
        %798 = vmatpush1.bf16.xpose.msra.mxu0 0
        %799 = vmatprep.subr.bf16.mxu0 0
        %800 = vmatpush1.bf16.xpose.msra.mxu0 0
        %801 = vmatprep.subr.bf16.mxu0 0
        %802 = vmatpush1.bf16.xpose.msra.mxu0 0
        %803 = vmatprep.subr.bf16.mxu0 0
        %804 = vmatpush1.bf16.xpose.msra.mxu0 0
        %805 = vmatprep.subr.bf16.mxu0 0
        %806 = vmatpush1.bf16.xpose.msra.mxu0 0
        %807 = vmatprep.subr.bf16.mxu0 0
        %808 = vmatpush1.bf16.xpose.msra.mxu0 0
        %809 = vmatprep.subr.bf16.mxu0 0
        %810 = vmatpush1.bf16.xpose.msra.mxu0 0
        %811 = vmatprep.subr.bf16.mxu0 0
        %812 = vmatpush1.bf16.xpose.msra.mxu0 0
        %813 = vmatprep.subr.bf16.mxu0 0
        %814 = vmatpush1.bf16.xpose.msra.mxu0 0
        %815 = vmatprep.subr.bf16.mxu0 0
        %816 = vmatpush1.bf16.xpose.msra.mxu0 0
        %817 = vmatprep.subr.bf16.mxu0 0
        %818 = vmatpush1.bf16.xpose.msra.mxu0 0
        %819 = vmatprep.subr.bf16.mxu0 0
        %820 = vmatpush1.bf16.xpose.msra.mxu0 0
        %821 = vmatprep.subr.bf16.mxu0 0
        %822 = vmatpush1.bf16.xpose.msra.mxu0 0
        %823 = vmatprep.subr.bf16.mxu0 0
        %824 = vmatpush1.bf16.xpose.msra.mxu0 0
        %825 = vmatprep.mubr.bf16.mxu0 0
        %826 = vmatmul.mubr.bf16.gmra.mrb[0].mxu0 %v788
        %v827 = vpop.f32.mrb[0].mxu0
        %v828 = vadd.f32 0.0, %v827
        %v829 = vpop.f32.mrb[0].mxu0
        %v830 = vpop.f32.mrb[0].mxu0
        %v831 = vadd.f32 0.0, %v830
        %v832 = vpop.f32.mrb[0].mxu0
        %833 = vdwg.mxu0
        %v834 = vmul.f32 %v828, 0.125
        %v835 = vmul.f32 %v831, 0.125
        %v836 = vsel %vm529, %v834, -1e+30
        %v837 = vsel %vm530, %v835, -1e+30
        %v838 = vsel %vm536, %v836, -inf
        %839 = vmax.xlane.f32.xlu0 %v838
        %v840 = vpop.xlane.xlu0 %839
        %v841 = vsel %vm536, %v837, -inf
        %842 = vmax.xlane.f32.xlu0 %v841
        %v843 = vpop.xlane.xlu0 %842
        %v844 = vsub.f32 %v836, %v840
        %v845 = vsub.f32 %v837, %v843
        %v846 = vmul.f32 %v844, 1.442695
        %v847 = vpow.pop %v846
        %v848 = vmul.f32 %v845, 1.442695
        %v849 = vpow.pop %v848
        %v850 = vsel %vm536, %v847, 0.0
        %851 = vadd.xlane.f32.xlu0 %v850
        %v852 = vpop.xlane.xlu0 %851
        %v853 = vsel %vm536, %v849, 0.0
        %854 = vadd.xlane.f32.xlu0 %v853
        %v855 = vpop.xlane.xlu0 %854
        %v856 = vrcp.pop %v852
        %v857 = vrcp.pop %v855
        %v858 = vmul.f32 %v847, %v856
        %v859 = vmul.f32 %v849, %v857
        %v860 = vpack.c.bf16 %v859, %v858
        %861 = vrot.lane.b32.xlu0 %v532, 96
        %v862 = vpop.permute.xlu0 %861
        %v865 = vsel %vm536, %v860, 0
        %867 = vmatprep.subr.bf16.mxu0 0
        %868 = vmatpush1.bf16.msra.mxu0 %v862
        %869 = vmatprep.subr.bf16.mxu0 0
        %870 = vmatpush1.bf16.msra.mxu0 0
        %871 = vmatprep.subr.bf16.mxu0 0
        %872 = vmatpush1.bf16.msra.mxu0 0
        %873 = vmatprep.subr.bf16.mxu0 0
        %874 = vmatpush1.bf16.msra.mxu0 0
        %875 = vmatprep.subr.bf16.mxu0 0
        %876 = vmatpush1.bf16.msra.mxu0 0
        %877 = vmatprep.subr.bf16.mxu0 0
        %878 = vmatpush1.bf16.msra.mxu0 0
        %879 = vmatprep.subr.bf16.mxu0 0
        %880 = vmatpush1.bf16.msra.mxu0 0
        %881 = vmatprep.subr.bf16.mxu0 0
        %882 = vmatpush1.bf16.msra.mxu0 0
        %883 = vmatprep.subr.bf16.mxu0 0
        %884 = vmatpush1.bf16.msra.mxu0 0
        %885 = vmatprep.subr.bf16.mxu0 0
        %886 = vmatpush1.bf16.msra.mxu0 0
        %887 = vmatprep.subr.bf16.mxu0 0
        %888 = vmatpush1.bf16.msra.mxu0 0
        %889 = vmatprep.subr.bf16.mxu0 0
        %890 = vmatpush1.bf16.msra.mxu0 0
        %891 = vmatprep.subr.bf16.mxu0 0
        %892 = vmatpush1.bf16.msra.mxu0 0
        %893 = vmatprep.subr.bf16.mxu0 0
        %894 = vmatpush1.bf16.msra.mxu0 0
        %895 = vmatprep.subr.bf16.mxu0 0
        %896 = vmatpush1.bf16.msra.mxu0 0
        %897 = vmatprep.subr.bf16.mxu0 0
        %898 = vmatpush1.bf16.msra.mxu0 0
        %899 = vmatprep.mubr.bf16.mxu0 0
        %900 = vmatmul.mubr.bf16.gmra.mrb[0].mxu0 %v865
        %v901 = vpop.f32.mrb[0].mxu0
        %v902 = vadd.f32 0.0, %v901
        %v903 = vpop.f32.mrb[0].mxu0
        %v904 = vpop.f32.mrb[0].mxu0
        %v905 = vadd.f32 0.0, %v904
        %v906 = vpop.f32.mrb[0].mxu0
        %907 = vdwg.mxu0
        %v908 = vpack.c.bf16 %v905, %v902
        %909 = vrot.lane.b32.xlu0 %v531, 80
        %v910 = vpop.permute.xlu0 %909
        %911 = vrot.lane.b32.xlu0 %v531, 16
        %v912 = vpop.permute.xlu0 %911
        %v914 = vsel %vm536, %v910, 0
        %v917 = vsel %vm536, %v912, 0
        %919 = vmatprep.subr.bf16.mxu0 0
        %920 = vmatpush1.bf16.xpose.msra.mxu0 %v917
        %921 = vmatprep.subr.bf16.mxu0 0
        %922 = vmatpush1.bf16.xpose.msra.mxu0 0
        %923 = vmatprep.subr.bf16.mxu0 0
        %924 = vmatpush1.bf16.xpose.msra.mxu0 0
        %925 = vmatprep.subr.bf16.mxu0 0
        %926 = vmatpush1.bf16.xpose.msra.mxu0 0
        %927 = vmatprep.subr.bf16.mxu0 0
        %928 = vmatpush1.bf16.xpose.msra.mxu0 0
        %929 = vmatprep.subr.bf16.mxu0 0
        %930 = vmatpush1.bf16.xpose.msra.mxu0 0
        %931 = vmatprep.subr.bf16.mxu0 0
        %932 = vmatpush1.bf16.xpose.msra.mxu0 0
        %933 = vmatprep.subr.bf16.mxu0 0
        %934 = vmatpush1.bf16.xpose.msra.mxu0 0
        %935 = vmatprep.subr.bf16.mxu0 0
        %936 = vmatpush1.bf16.xpose.msra.mxu0 0
        %937 = vmatprep.subr.bf16.mxu0 0
        %938 = vmatpush1.bf16.xpose.msra.mxu0 0
        %939 = vmatprep.subr.bf16.mxu0 0
        %940 = vmatpush1.bf16.xpose.msra.mxu0 0
        %941 = vmatprep.subr.bf16.mxu0 0
        %942 = vmatpush1.bf16.xpose.msra.mxu0 0
        %943 = vmatprep.subr.bf16.mxu0 0
        %944 = vmatpush1.bf16.xpose.msra.mxu0 0
        %945 = vmatprep.subr.bf16.mxu0 0
        %946 = vmatpush1.bf16.xpose.msra.mxu0 0
        %947 = vmatprep.subr.bf16.mxu0 0
        %948 = vmatpush1.bf16.xpose.msra.mxu0 0
        %949 = vmatprep.subr.bf16.mxu0 0
        %950 = vmatpush1.bf16.xpose.msra.mxu0 0
        %951 = vmatprep.mubr.bf16.mxu0 0
        %952 = vmatmul.mubr.bf16.gmra.mrb[0].mxu0 %v914
        %v953 = vpop.f32.mrb[0].mxu0
        %v954 = vadd.f32 0.0, %v953
        %v955 = vpop.f32.mrb[0].mxu0
        %v956 = vpop.f32.mrb[0].mxu0
        %v957 = vadd.f32 0.0, %v956
        %v958 = vpop.f32.mrb[0].mxu0
        %959 = vdwg.mxu0
        %v960 = vmul.f32 %v954, 0.125
        %v961 = vmul.f32 %v957, 0.125
        %v962 = vsel %vm529, %v960, -1e+30
        %v963 = vsel %vm530, %v961, -1e+30
        %v964 = vsel %vm536, %v962, -inf
        %965 = vmax.xlane.f32.xlu0 %v964
        %v966 = vpop.xlane.xlu0 %965
        %v967 = vsel %vm536, %v963, -inf
        %968 = vmax.xlane.f32.xlu0 %v967
        %v969 = vpop.xlane.xlu0 %968
        %v970 = vsub.f32 %v962, %v966
        %v971 = vsub.f32 %v963, %v969
        %v972 = vmul.f32 %v970, 1.442695
        %v973 = vpow.pop %v972
        %v974 = vmul.f32 %v971, 1.442695
        %v975 = vpow.pop %v974
        %v976 = vsel %vm536, %v973, 0.0
        %977 = vadd.xlane.f32.xlu0 %v976
        %v978 = vpop.xlane.xlu0 %977
        %v979 = vsel %vm536, %v975, 0.0
        %980 = vadd.xlane.f32.xlu0 %v979
        %v981 = vpop.xlane.xlu0 %980
        %v982 = vrcp.pop %v978
        %v983 = vrcp.pop %v981
        %v984 = vmul.f32 %v973, %v982
        %v985 = vmul.f32 %v975, %v983
        %v986 = vpack.c.bf16 %v985, %v984
        %987 = vrot.lane.b32.xlu0 %v532, 80
        %v988 = vpop.permute.xlu0 %987
        %v991 = vsel %vm536, %v986, 0
        %993 = vmatprep.subr.bf16.mxu0 0
        %994 = vmatpush1.bf16.msra.mxu0 %v988
        %995 = vmatprep.subr.bf16.mxu0 0
        %996 = vmatpush1.bf16.msra.mxu0 0
        %997 = vmatprep.subr.bf16.mxu0 0
        %998 = vmatpush1.bf16.msra.mxu0 0
        %999 = vmatprep.subr.bf16.mxu0 0
        %1000 = vmatpush1.bf16.msra.mxu0 0
        %1001 = vmatprep.subr.bf16.mxu0 0
        %1002 = vmatpush1.bf16.msra.mxu0 0
        %1003 = vmatprep.subr.bf16.mxu0 0
        %1004 = vmatpush1.bf16.msra.mxu0 0
        %1005 = vmatprep.subr.bf16.mxu0 0
        %1006 = vmatpush1.bf16.msra.mxu0 0
        %1007 = vmatprep.subr.bf16.mxu0 0
        %1008 = vmatpush1.bf16.msra.mxu0 0
        %1009 = vmatprep.subr.bf16.mxu0 0
        %1010 = vmatpush1.bf16.msra.mxu0 0
        %1011 = vmatprep.subr.bf16.mxu0 0
        %1012 = vmatpush1.bf16.msra.mxu0 0
        %1013 = vmatprep.subr.bf16.mxu0 0
        %1014 = vmatpush1.bf16.msra.mxu0 0
        %1015 = vmatprep.subr.bf16.mxu0 0
        %1016 = vmatpush1.bf16.msra.mxu0 0
        %1017 = vmatprep.subr.bf16.mxu0 0
        %1018 = vmatpush1.bf16.msra.mxu0 0
        %1019 = vmatprep.subr.bf16.mxu0 0
        %1020 = vmatpush1.bf16.msra.mxu0 0
        %1021 = vmatprep.subr.bf16.mxu0 0
        %1022 = vmatpush1.bf16.msra.mxu0 0
        %1023 = vmatprep.subr.bf16.mxu0 0
        %1024 = vmatpush1.bf16.msra.mxu0 0
        %1025 = vmatprep.mubr.bf16.mxu0 0
        %1026 = vmatmul.mubr.bf16.gmra.mrb[0].mxu0 %v991
        %v1027 = vpop.f32.mrb[0].mxu0
        %v1028 = vadd.f32 0.0, %v1027
        %v1029 = vpop.f32.mrb[0].mxu0
        %v1030 = vpop.f32.mrb[0].mxu0
        %v1031 = vadd.f32 0.0, %v1030
        %v1032 = vpop.f32.mrb[0].mxu0
        %1033 = vdwg.mxu0
        %v1034 = vpack.c.bf16 %v1031, %v1028
        %1036 = vrot.lane.b32.xlu0 %v782, 16
        %v1037 = vpop.permute.xlu0 %1036
        %1039 = vrot.lane.b32.xlu0 %v908, 32
        %v1040 = vpop.permute.xlu0 %1039
        %1042 = vrot.lane.b32.xlu0 %v1034, 48
        %v1043 = vpop.permute.xlu0 %1042
        %v1046 = vsel %vm536, %v655, %v1037
        %vm1047 = vcmask 261120
        %v1049 = vsel %vm1047, %v1046, %v1040
        %vm1050 = vcmask 392192
        %v1052 = vsel %vm1050, %v1049, %v1043
        %v1053 = vld [vmem:[#allocation10] sm:$0xf]
        %v1054 = vld [vmem:[#allocation10 + $0x4] sm:$0xf]
        %v1055 = vld [vmem:[#allocation10 + $0x8] sm:$0xf]
        %v1056 = vld [vmem:[#allocation10 + $0xc] sm:$0xf]
        %v1057 = vld [vmem:[#allocation10 + $0x10] sm:$0xf]
        %v1058 = vld [vmem:[#allocation10 + $0x14] sm:$0xf]
        %v1059 = vld [vmem:[#allocation10 + $0x18] sm:$0xf]
        %v1060 = vld [vmem:[#allocation10 + $0x1c] sm:$0xf]
        %v1061 = vlaneseq
        %v1062 = vshrl.u32 %v1061, 7
        %v1063 = vsub.s32 4, %v1062
        %v1064 = vrot.slane %v387, %v1063
        %v1073 = vunpack.c.l.b16 %v1053
        %v1074 = vunpack.c.l.b16 %v1054
        %v1075 = vunpack.c.l.b16 %v1055
        %v1076 = vunpack.c.l.b16 %v1056
        %v1077 = vunpack.c.l.b16 %v1057
        %v1078 = vunpack.c.l.b16 %v1058
        %v1079 = vunpack.c.l.b16 %v1059
        %v1080 = vunpack.c.l.b16 %v1060
        %v1081 = vpack.c.b16 %v1074, %v1073
        %v1082 = vpack.c.b16 %v1076, %v1075
        %v1083 = vpack.c.b16 %v1078, %v1077
        %v1084 = vpack.c.b16 %v1080, %v1079
        %v1089 = vsel %vm389, %v1052, 0
        %1091 = vmatprep.subr.bf16.mxu0 0
        %1092 = vmatpush1.bf16.msra.mxu0 %v1081
        %1093 = vmatprep.subr.bf16.mxu0 0
        %1094 = vmatpush1.bf16.msra.mxu0 %v1082
        %1095 = vmatprep.subr.bf16.mxu0 0
        %1096 = vmatpush1.bf16.msra.mxu0 %v1083
        %1097 = vmatprep.subr.bf16.mxu0 0
        %1098 = vmatpush1.bf16.msra.mxu0 %v1084
        %1099 = vmatprep.subr.bf16.mxu0 0
        %1100 = vmatpush1.bf16.msra.mxu0 0
        %1101 = vmatprep.subr.bf16.mxu0 0
        %1102 = vmatpush1.bf16.msra.mxu0 0
        %1103 = vmatprep.subr.bf16.mxu0 0
        %1104 = vmatpush1.bf16.msra.mxu0 0
        %1105 = vmatprep.subr.bf16.mxu0 0
        %1106 = vmatpush1.bf16.msra.mxu0 0
        %1107 = vmatprep.subr.bf16.mxu0 0
        %1108 = vmatpush1.bf16.msra.mxu0 0
        %1109 = vmatprep.subr.bf16.mxu0 0
        %1110 = vmatpush1.bf16.msra.mxu0 0
        %1111 = vmatprep.subr.bf16.mxu0 0
        %1112 = vmatpush1.bf16.msra.mxu0 0
        %1113 = vmatprep.subr.bf16.mxu0 0
        %1114 = vmatpush1.bf16.msra.mxu0 0
        %1115 = vmatprep.subr.bf16.mxu0 0
        %1116 = vmatpush1.bf16.msra.mxu0 0
        %1117 = vmatprep.subr.bf16.mxu0 0
        %1118 = vmatpush1.bf16.msra.mxu0 0
        %1119 = vmatprep.subr.bf16.mxu0 0
        %1120 = vmatpush1.bf16.msra.mxu0 0
        %1121 = vmatprep.subr.bf16.mxu0 0
        %1122 = vmatpush1.bf16.msra.mxu0 0
        %1123 = vmatprep.mubr.bf16.mxu0 0
        %1124 = vmatmul.mubr.bf16.gmra.mrb[0].mxu0 %v1089
        %v1125 = vpop.f32.mrb[0].mxu0
        %v1126 = vadd.f32 %v1064, %v1125
        %v1127 = vpop.f32.mrb[0].mxu0
        %v1128 = vpop.f32.mrb[0].mxu0
        %v1129 = vadd.f32 %v1064, %v1128
        %v1130 = vpop.f32.mrb[0].mxu0
        %1131 = vdwg.mxu0
        %v1132 = vadd.f32 %v385, %v1126
        %v1133 = vadd.f32 %v386, %v1129
        %v1134 = vsel %vm389, %v1132, 0.0
        %1135 = vadd.xlane.f32.xlu0 %v1134
        %v1136 = vpop.xlane.xlu0 %1135
        %v1137 = vsel %vm389, %v1133, 0.0
        %1138 = vadd.xlane.f32.xlu0 %v1137
        %v1139 = vpop.xlane.xlu0 %1138
        %v1140 = vmul.f32 %v1136, %v396
        %v1141 = vmul.f32 %v1139, %v396
        %v1142 = vsub.f32 %v1132, %v1140
        %v1143 = vsub.f32 %v1133, %v1141
        %v1144 = vmul.f32 %v1142, %v1142
        %v1145 = vmul.f32 %v1143, %v1143
        %v1146 = vsel %vm389, %v1144, 0.0
        %1147 = vadd.xlane.f32.xlu0 %v1146
        %v1148 = vpop.xlane.xlu0 %1147
        %v1149 = vsel %vm389, %v1145, 0.0
        %1150 = vadd.xlane.f32.xlu0 %v1149
        %v1151 = vpop.xlane.xlu0 %1150
        %v1152 = vmul.f32 %v1148, %v396
        %v1153 = vmul.f32 %v1151, %v396
        %v1154 = vadd.f32 %v1152, 1e-05
        %v1155 = vadd.f32 %v1153, 1e-05
        %v1156 = vrsqrt.pop %v1154
        %v1157 = vrsqrt.pop %v1155
        %v1158 = vmul.f32 %v1142, %v1156
        %v1159 = vmul.f32 %v1143, %v1157
        %v1160 = vlaneseq
        %v1161 = vshrl.u32 %v1160, 7
        %v1162 = vsub.s32 2, %v1161
        %v1163 = vrot.slane %v387, %v1162
        %v1164 = vmul.f32 %v1158, %v1163
        %v1165 = vmul.f32 %v1159, %v1163
        %v1166 = vlaneseq
        %v1167 = vshrl.u32 %v1166, 7
        %v1168 = vsub.s32 3, %v1167
        %v1169 = vrot.slane %v387, %v1168
        %v1170 = vadd.f32 %v1164, %v1169
        %v1171 = vadd.f32 %v1165, %v1169
        %v1172 = vpack.c.bf16 %v1171, %v1170
        %v1173 = vld [vmem:[#allocation11] sm:$0xff]
        %v1174 = vld [vmem:[#allocation11 + $0x8] sm:$0xff]
        %v1175 = vld [vmem:[#allocation11 + $0x10] sm:$0xff]
        %v1176 = vld [vmem:[#allocation11 + $0x18] sm:$0xff]
        %v1177 = vld [vmem:[#allocation11 + $0x20] sm:$0xff]
        %v1178 = vld [vmem:[#allocation11 + $0x28] sm:$0xff]
        %v1179 = vld [vmem:[#allocation11 + $0x30] sm:$0xff]
        %v1180 = vld [vmem:[#allocation11 + $0x38] sm:$0xff]
        %v1182 = vlaneseq
        %v1183 = vshrl.u32 %v1182, 7
        %v1184 = vsub.s32 0, %v1183
        %v1185 = vrot.slane %v388, %v1184
        %v1186 = vlaneseq
        %v1187 = vshrl.u32 %v1186, 7
        %v1188 = vsub.s32 1, %v1187
        %v1189 = vrot.slane %v388, %v1188
        %v1200 = vunpack.c.l.b16 %v1173
        %v1201 = vunpack.c.h.b16 %v1173
        %v1202 = vunpack.c.l.b16 %v1174
        %v1203 = vunpack.c.h.b16 %v1174
        %v1204 = vunpack.c.l.b16 %v1175
        %v1205 = vunpack.c.h.b16 %v1175
        %v1206 = vunpack.c.l.b16 %v1176
        %v1207 = vunpack.c.h.b16 %v1176
        %v1208 = vunpack.c.l.b16 %v1177
        %v1209 = vunpack.c.h.b16 %v1177
        %v1210 = vunpack.c.l.b16 %v1178
        %v1211 = vunpack.c.h.b16 %v1178
        %v1212 = vunpack.c.l.b16 %v1179
        %v1213 = vunpack.c.h.b16 %v1179
        %v1214 = vunpack.c.l.b16 %v1180
        %v1215 = vunpack.c.h.b16 %v1180
        %v1216 = vpack.c.b16 %v1202, %v1200
        %v1217 = vpack.c.b16 %v1203, %v1201
        %v1218 = vpack.c.b16 %v1206, %v1204
        %v1219 = vpack.c.b16 %v1207, %v1205
        %v1220 = vpack.c.b16 %v1210, %v1208
        %v1221 = vpack.c.b16 %v1211, %v1209
        %v1222 = vpack.c.b16 %v1214, %v1212
        %v1223 = vpack.c.b16 %v1215, %v1213
        %v1233 = vsel %vm389, %v1172, 0
        %1235 = vmatprep.subr.bf16.mxu0 %v1217
        %1236 = vmatpush1.bf16.msra.mxu0 %v1216
        %1237 = vmatprep.subr.bf16.mxu0 %v1219
        %1238 = vmatpush1.bf16.msra.mxu0 %v1218
        %1239 = vmatprep.subr.bf16.mxu0 %v1221
        %1240 = vmatpush1.bf16.msra.mxu0 %v1220
        %1241 = vmatprep.subr.bf16.mxu0 %v1223
        %1242 = vmatpush1.bf16.msra.mxu0 %v1222
        %1243 = vmatprep.subr.bf16.mxu0 0
        %1244 = vmatpush1.bf16.msra.mxu0 0
        %1245 = vmatprep.subr.bf16.mxu0 0
        %1246 = vmatpush1.bf16.msra.mxu0 0
        %1247 = vmatprep.subr.bf16.mxu0 0
        %1248 = vmatpush1.bf16.msra.mxu0 0
        %1249 = vmatprep.subr.bf16.mxu0 0
        %1250 = vmatpush1.bf16.msra.mxu0 0
        %1251 = vmatprep.subr.bf16.mxu0 0
        %1252 = vmatpush1.bf16.msra.mxu0 0
        %1253 = vmatprep.subr.bf16.mxu0 0
        %1254 = vmatpush1.bf16.msra.mxu0 0
        %1255 = vmatprep.subr.bf16.mxu0 0
        %1256 = vmatpush1.bf16.msra.mxu0 0
        %1257 = vmatprep.subr.bf16.mxu0 0
        %1258 = vmatpush1.bf16.msra.mxu0 0
        %1259 = vmatprep.subr.bf16.mxu0 0
        %1260 = vmatpush1.bf16.msra.mxu0 0
        %1261 = vmatprep.subr.bf16.mxu0 0
        %1262 = vmatpush1.bf16.msra.mxu0 0
        %1263 = vmatprep.subr.bf16.mxu0 0
        %1264 = vmatpush1.bf16.msra.mxu0 0
        %1265 = vmatprep.subr.bf16.mxu0 0
        %1266 = vmatpush1.bf16.msra.mxu0 0
        %1267 = vmatprep.mubr.bf16.mxu0 0
        %1268 = vmatmul.mubr.bf16.gmra.mrb[0].mxu0 %v1233
        %v1269 = vpop.f32.mrb[0].mxu0
        %v1270 = vadd.f32 %v1185, %v1269
        %v1271 = vpop.f32.mrb[0].mxu0
        %v1272 = vadd.f32 %v1189, %v1271
        %v1273 = vpop.f32.mrb[0].mxu0
        %v1274 = vadd.f32 %v1185, %v1273
        %v1275 = vpop.f32.mrb[0].mxu0
        %v1276 = vadd.f32 %v1189, %v1275
        %1277 = vdwg.mxu0
        %v1278 = vmax.f32 %v1270, 0.0
        %v1279 = vmax.f32 %v1272, 0.0
        %v1280 = vmax.f32 %v1274, 0.0
        %v1281 = vmax.f32 %v1276, 0.0
        %v1282 = vpack.c.bf16 %v1280, %v1278
        %v1283 = vpack.c.bf16 %v1281, %v1279
        %v1284 = vld [vmem:[#allocation13] sm:$0xf]
        %v1285 = vld [vmem:[#allocation13 + $0x4] sm:$0xf]
        %v1286 = vld [vmem:[#allocation13 + $0x8] sm:$0xf]
        %v1287 = vld [vmem:[#allocation13 + $0xc] sm:$0xf]
        %v1288 = vld [vmem:[#allocation13 + $0x10] sm:$0xf]
        %v1289 = vld [vmem:[#allocation13 + $0x14] sm:$0xf]
        %v1290 = vld [vmem:[#allocation13 + $0x18] sm:$0xf]
        %v1291 = vld [vmem:[#allocation13 + $0x1c] sm:$0xf]
        %v1292 = vld [vmem:[#allocation13 + $0x20] sm:$0xf]
        %v1293 = vld [vmem:[#allocation13 + $0x24] sm:$0xf]
        %v1294 = vld [vmem:[#allocation13 + $0x28] sm:$0xf]
        %v1295 = vld [vmem:[#allocation13 + $0x2c] sm:$0xf]
        %v1296 = vld [vmem:[#allocation13 + $0x30] sm:$0xf]
        %v1297 = vld [vmem:[#allocation13 + $0x34] sm:$0xf]
        %v1298 = vld [vmem:[#allocation13 + $0x38] sm:$0xf]
        %v1299 = vld [vmem:[#allocation13 + $0x3c] sm:$0xf]
        %v1300 = vld [vmem:[#allocation13 + $0x40] sm:$0xf]
        %v1301 = vld [vmem:[#allocation13 + $0x44] sm:$0xf]
        %v1302 = vld [vmem:[#allocation13 + $0x48] sm:$0xf]
        %v1303 = vld [vmem:[#allocation13 + $0x4c] sm:$0xf]
        %v1304 = vld [vmem:[#allocation13 + $0x50] sm:$0xf]
        %v1305 = vld [vmem:[#allocation13 + $0x54] sm:$0xf]
        %v1306 = vld [vmem:[#allocation13 + $0x58] sm:$0xf]
        %v1307 = vld [vmem:[#allocation13 + $0x5c] sm:$0xf]
        %v1308 = vld [vmem:[#allocation13 + $0x60] sm:$0xf]
        %v1309 = vld [vmem:[#allocation13 + $0x64] sm:$0xf]
        %v1310 = vld [vmem:[#allocation13 + $0x68] sm:$0xf]
        %v1311 = vld [vmem:[#allocation13 + $0x6c] sm:$0xf]
        %v1312 = vld [vmem:[#allocation13 + $0x70] sm:$0xf]
        %v1313 = vld [vmem:[#allocation13 + $0x74] sm:$0xf]
        %v1314 = vld [vmem:[#allocation13 + $0x78] sm:$0xf]
        %v1315 = vld [vmem:[#allocation13 + $0x7c] sm:$0xf]
        %v1316 = vlaneseq
        %v1317 = vshrl.u32 %v1316, 7
        %v1318 = vsub.s32 5, %v1317
        %v1319 = vrot.slane %v387, %v1318
        %v1352 = vunpack.c.l.b16 %v1284
        %v1353 = vunpack.c.l.b16 %v1285
        %v1354 = vunpack.c.l.b16 %v1286
        %v1355 = vunpack.c.l.b16 %v1287
        %v1356 = vunpack.c.l.b16 %v1288
        %v1357 = vunpack.c.l.b16 %v1289
        %v1358 = vunpack.c.l.b16 %v1290
        %v1359 = vunpack.c.l.b16 %v1291
        %v1360 = vunpack.c.l.b16 %v1292
        %v1361 = vunpack.c.l.b16 %v1293
        %v1362 = vunpack.c.l.b16 %v1294
        %v1363 = vunpack.c.l.b16 %v1295
        %v1364 = vunpack.c.l.b16 %v1296
        %v1365 = vunpack.c.l.b16 %v1297
        %v1366 = vunpack.c.l.b16 %v1298
        %v1367 = vunpack.c.l.b16 %v1299
        %v1368 = vunpack.c.l.b16 %v1300
        %v1369 = vunpack.c.l.b16 %v1301
        %v1370 = vunpack.c.l.b16 %v1302
        %v1371 = vunpack.c.l.b16 %v1303
        %v1372 = vunpack.c.l.b16 %v1304
        %v1373 = vunpack.c.l.b16 %v1305
        %v1374 = vunpack.c.l.b16 %v1306
        %v1375 = vunpack.c.l.b16 %v1307
        %v1376 = vunpack.c.l.b16 %v1308
        %v1377 = vunpack.c.l.b16 %v1309
        %v1378 = vunpack.c.l.b16 %v1310
        %v1379 = vunpack.c.l.b16 %v1311
        %v1380 = vunpack.c.l.b16 %v1312
        %v1381 = vunpack.c.l.b16 %v1313
        %v1382 = vunpack.c.l.b16 %v1314
        %v1383 = vunpack.c.l.b16 %v1315
        %v1384 = vpack.c.b16 %v1353, %v1352
        %v1385 = vpack.c.b16 %v1355, %v1354
        %v1386 = vpack.c.b16 %v1357, %v1356
        %v1387 = vpack.c.b16 %v1359, %v1358
        %v1388 = vpack.c.b16 %v1361, %v1360
        %v1389 = vpack.c.b16 %v1363, %v1362
        %v1390 = vpack.c.b16 %v1365, %v1364
        %v1391 = vpack.c.b16 %v1367, %v1366
        %v1392 = vpack.c.b16 %v1369, %v1368
        %v1393 = vpack.c.b16 %v1371, %v1370
        %v1394 = vpack.c.b16 %v1373, %v1372
        %v1395 = vpack.c.b16 %v1375, %v1374
        %v1396 = vpack.c.b16 %v1377, %v1376
        %v1397 = vpack.c.b16 %v1379, %v1378
        %v1398 = vpack.c.b16 %v1381, %v1380
        %v1399 = vpack.c.b16 %v1383, %v1382
        %1416 = vmatprep.subr.bf16.mxu0 0
        %1417 = vmatpush1.bf16.msra.mxu0 %v1384
        %1418 = vmatprep.subr.bf16.mxu0 0
        %1419 = vmatpush1.bf16.msra.mxu0 %v1385
        %1420 = vmatprep.subr.bf16.mxu0 0
        %1421 = vmatpush1.bf16.msra.mxu0 %v1386
        %1422 = vmatprep.subr.bf16.mxu0 0
        %1423 = vmatpush1.bf16.msra.mxu0 %v1387
        %1424 = vmatprep.subr.bf16.mxu0 0
        %1425 = vmatpush1.bf16.msra.mxu0 %v1388
        %1426 = vmatprep.subr.bf16.mxu0 0
        %1427 = vmatpush1.bf16.msra.mxu0 %v1389
        %1428 = vmatprep.subr.bf16.mxu0 0
        %1429 = vmatpush1.bf16.msra.mxu0 %v1390
        %1430 = vmatprep.subr.bf16.mxu0 0
        %1431 = vmatpush1.bf16.msra.mxu0 %v1391
        %1432 = vmatprep.subr.bf16.mxu0 0
        %1433 = vmatpush1.bf16.msra.mxu0 %v1392
        %1434 = vmatprep.subr.bf16.mxu0 0
        %1435 = vmatpush1.bf16.msra.mxu0 %v1393
        %1436 = vmatprep.subr.bf16.mxu0 0
        %1437 = vmatpush1.bf16.msra.mxu0 %v1394
        %1438 = vmatprep.subr.bf16.mxu0 0
        %1439 = vmatpush1.bf16.msra.mxu0 %v1395
        %1440 = vmatprep.subr.bf16.mxu0 0
        %1441 = vmatpush1.bf16.msra.mxu0 %v1396
        %1442 = vmatprep.subr.bf16.mxu0 0
        %1443 = vmatpush1.bf16.msra.mxu0 %v1397
        %1444 = vmatprep.subr.bf16.mxu0 0
        %1445 = vmatpush1.bf16.msra.mxu0 %v1398
        %1446 = vmatprep.subr.bf16.mxu0 0
        %1447 = vmatpush1.bf16.msra.mxu0 %v1399
        %1448 = vmatprep.mubr.bf16.mxu0 %v1283
        %1449 = vmatmul.mubr.bf16.gmra.mrb[0].mxu0 %v1282
        %v1450 = vpop.f32.mrb[0].mxu0
        %v1451 = vadd.f32 %v1319, %v1450
        %v1452 = vpop.f32.mrb[0].mxu0
        %v1453 = vpop.f32.mrb[0].mxu0
        %v1454 = vadd.f32 %v1319, %v1453
        %v1455 = vpop.f32.mrb[0].mxu0
        %1456 = vdwg.mxu0
        %v1457 = vadd.f32 %v1132, %v1451
        %v1458 = vadd.f32 %v1133, %v1454
        %v1459 = vpack.c.bf16 %v1458, %v1457
        %v1461 = vunpack.c.l.b16 %v1459
        %v1462 = vunpack.c.h.b16 %v1459
        %v1463 = vpack.c.b16 %v1461, %v1461
        %v1464 = vpack.c.b16 %v1462, %v1462
        %vm1467 = vcmask 519168
        %1468 = vst.msk [vmem:[%s379] sm:$0xf] %vm1467, %v1463
        %1469 = vst.msk [vmem:[%s379 + $0x4] sm:$0xf] %vm1467, %v1464
        %s1470 = sand.u32 %s187, 1
        %s1471 = scalar_lea.sflag [#allocation4], %s1470
        %s1472 = sand.u32 %s187, 1
        %s1473 = smul.addr %s1472, 8
        %s1474 = scalar_lea.vmem [#allocation14], %s1473
        // Predicated region
        $region77: #{tpu_custom_call.1} parent=47 // pred_check
          %p1475 = pneg %p197
        $region78: #{tpu_custom_call.1} parent=47 // pred_check_branch
          %1477 = sbr.rel (%p1475) target = $region80
        $region79: #{tpu_custom_call.1} parent=47 // pred_region
          %s1478 = smul.u32 2, %s27
          %s1480 = ssub.s32 128, 128
          %1481 = vsyncadd %s1471, %s1480
          %s1482 = smul.addr %s1478, 64
          %s1483 = scalar_lea.hbm %s7, %s1482
          %s1484 = sshll.u32 %s1474, 4
          %s1485 = int_to_ptr.vmem [resolvable:$true] %s1484
          %1490 = dma.vmem_to_hbm [thread:$0]  %s1485, 128, %s1483, %s1471, 64, 64, 4
        $region80: #{tpu_custom_call.1} parent=47 // pred_fallthru
          _
      $region48: #{tpu_custom_call.1} parent=5 // pred_fallthru
        _
      %p1491 = scmp.le.s32.totalorder 2, %s22
      // Predicated region
      $region81: #{tpu_custom_call.1} parent=5 // pred_check
        %p1492 = pneg %p1491
      $region82: #{tpu_custom_call.1} parent=5 // pred_check_branch
        %1494 = sbr.rel (%p1492) target = $region84
      $region83: #{tpu_custom_call.1} parent=5 // pred_region
        %s1495 = ssub.s32 %s22, 2
        // Predicated region
        $region85: #{tpu_custom_call.1} parent=83 // pred_check
          %p1496 = pneg %p203
        $region86: #{tpu_custom_call.1} parent=83 // pred_check_branch
          %1498 = sbr.rel (%p1496) target = $region88
        $region87: #{tpu_custom_call.1} parent=83 // pred_region
          %s1499 = sand.u32 %s188, 1
          %s1500 = scalar_lea.sflag [#allocation4], %s1499
          %s1501 = sand.u32 %s188, 1
          %s1502 = smul.addr %s1501, 8
          %s1503 = scalar_lea.vmem [#allocation14], %s1502
          %1504 = dma.done %s1500, 128
        $region88: #{tpu_custom_call.1} parent=83 // pred_fallthru
          _
      $region84: #{tpu_custom_call.1} parent=5 // pred_fallthru
        _
    $region6: #{tpu_custom_call.1} parent=1 // loop_footer
      %s26 = sadd.s32 1, %s22
    $region7: #{tpu_custom_call.1} parent=1 // loop_footer_branch
      %21 = sbr.rel target = $region3
    $region8: #{tpu_custom_call.1} parent=1 // loop_exit
      _
    %1505 = vsyncpa [#allocation3], 1
    %s1506 = scalar_lea.sflag [#allocation3], 1
    %1507 = vsyncpa %s1506, 1
    %1508 = vsyncpa [#allocation6], 1
    %1509 = vsyncpa [#allocation9], 1
    %1510 = vsyncpa [#allocation12], 1
    %1511 = vsyncpa [#allocation4], 1
    %s1512 = scalar_lea.sflag [#allocation4], 1
    %1513 = vsyncpa %s1512, 1

</llo_original>
